<compile_context>
chip_gen: v5e
topology: v5e:2x2
jax: 0.10.0
libtpu: 0.0.40
codegen_flags: <defaults>
</compile_context>

<pallas_src>
import math

import jax
import jax.numpy as jnp
import numpy as np
from jax import lax
from jax.experimental import pallas as pl
from jax.experimental.pallas import tpu as pltpu

EPS = 1e-5
# MXU operand dtype. bfloat16 halves MXU passes on the serial recurrent step;
# float32 keeps exact parity with the f32 reference (tolerance 1e-3).
MATMUL_DTYPE = jnp.float32


def _make_kernel(layer_num: int, N: int, L: int, S: int, H: int):
    P = layer_num
    G = 4 * H

    def kernel(x_ref, w1t_ref, wih0t_ref, recw_ref, bias_ref, w2t_ref,
               small_ref, h0_ref, c0_ref, out_ref, hn_ref, cn_ref):
        # ---- prev_proj: Linear(S,S) -> BatchNorm1d(S) (batch stats) -> Tanh ----
        x = x_ref[...]                                      # (L*N, S) time-major
        b1 = small_ref[0:1, :]
        g1 = small_ref[1:2, :]
        be1 = small_ref[2:3, :]
        h = jnp.dot(x.astype(MATMUL_DTYPE), w1t_ref[...],
                    preferred_element_type=jnp.float32) + b1
        mean = jnp.mean(h, axis=0, keepdims=True)
        var = jnp.mean((h - mean) ** 2, axis=0, keepdims=True)
        h = jnp.tanh((h - mean) * lax.rsqrt(var + EPS) * g1 + be1)

        # ---- LSTM ----
        # Layer-0 input projection for ALL timesteps at once (off critical path);
        # fused bias (bih0 + bhh0) included.
        gx0 = jnp.dot(h.astype(MATMUL_DTYPE), wih0t_ref[...],
                      preferred_element_type=jnp.float32) + bias_ref[0:1, :]

        recw = recw_ref[...]                                # (P*H, P*4H)
        biases = [bias_ref[l:l + 1, :] for l in range(P)]
        h_state = [h0_ref[l, :, :] for l in range(P)]       # each (N, H)
        c_state = [c0_ref[l, :, :] for l in range(P)]
        outs = []

        # Wavefront schedule: step w runs layer l at time t = w - l.  Layers
        # are independent within a step, so a single fused MXU call computes
        # every layer's recurrent (and l>=1 input-side) projection.
        # TODO(synk): for large L, replace the unrolled Python loop with
        # lax.fori_loop(..., unroll=4) to bound vreg live ranges.
        for w in range(L + P - 1):
            lhs = jnp.concatenate(h_state, axis=1) if P > 1 else h_state[0]
            fused = jnp.dot(lhs.astype(MATMUL_DTYPE), recw,
                            preferred_element_type=jnp.float32)  # (N, P*4H)
            new_h = list(h_state)
            new_c = list(c_state)
            for l in range(P):
                t = w - l
                if t < 0 or t >= L:
                    continue                                 # layer idle this step
                gates = fused[:, l * G:(l + 1) * G]          # (N, 4H) lane slice
                gates = gates + (gx0[t * N:(t + 1) * N, :] if l == 0 else biases[l])
                sig = jax.nn.sigmoid(gates)                  # full-width EUP push
                tnh = jnp.tanh(gates)
                i_g = sig[:, 0 * H:1 * H]
                f_g = sig[:, 1 * H:2 * H]
                g_g = tnh[:, 2 * H:3 * H]
                o_g = sig[:, 3 * H:4 * H]
                ct = f_g * c_state[l] + i_g * g_g
                ht = o_g * jnp.tanh(ct)
                new_c[l] = ct
                new_h[l] = ht
                if l == P - 1:
                    outs.append(ht)                          # stays in vregs
            h_state, c_state = new_h, new_c

        for l in range(P):
            hn_ref[l, :, :] = h_state[l]
            cn_ref[l, :, :] = c_state[l]

        # ---- succ_proj: Linear(H,S) -> BatchNorm1d(S) -> Tanh -> Linear(S,1) ----
        seq = jnp.concatenate(outs, axis=0)                  # (L*N, H) time-major
        b2 = small_ref[3:4, :]
        g2 = small_ref[4:5, :]
        be2 = small_ref[5:6, :]
        w3r = small_ref[6:7, :]                              # (1, S)
        b3 = small_ref[7:8, 0:1]                             # (1, 1)
        y = jnp.dot(seq.astype(MATMUL_DTYPE), w2t_ref[...],
                    preferred_element_type=jnp.float32) + b2
        m2 = jnp.mean(y, axis=0, keepdims=True)
        v2 = jnp.mean((y - m2) ** 2, axis=0, keepdims=True)
        y = jnp.tanh((y - m2) * lax.rsqrt(v2 + EPS) * g2 + be2)
        # Lane-dense output row: (1, L*N) = w3 (1,S) @ y^T (contract over S).
        out_row = lax.dot_general(w3r, y, (((1,), (1,)), ((), ())),
                                  preferred_element_type=jnp.float32) + b3
        out_ref[...] = out_row

    return kernel


def init_params(key, state_channels: int, hidden_size: int, layer_num: int):
    S, H = state_channels, hidden_size
    p = {'S': S, 'H': H, 'layer_num': layer_num}

    def unif(key, shape, fan_in):
        bound = 1.0 / math.sqrt(fan_in)
        return jax.random.uniform(key, shape, jnp.float32, -bound, bound)

    keys = jax.random.split(key, 8 + 4 * layer_num)
    k = iter(keys)
    # prev_proj
    p['w1'] = unif(next(k), (S, S), S)
    p['b1'] = unif(next(k), (1, S), S)
    p['g1'] = jnp.ones((1, S), jnp.float32)
    p['be1'] = jnp.zeros((1, S), jnp.float32)
    # lstm
    for l in range(layer_num):
        in_sz = S if l == 0 else H
        p[f'wih{l}'] = unif(next(k), (4 * H, in_sz), H)
        p[f'whh{l}'] = unif(next(k), (4 * H, H), H)
        p[f'bih{l}'] = unif(next(k), (1, 4 * H), H)
        p[f'bhh{l}'] = unif(next(k), (1, 4 * H), H)
    # succ_proj
    p['w2'] = unif(next(k), (S, H), H)
    p['b2'] = unif(next(k), (1, S), H)
    p['g2'] = jnp.ones((1, S), jnp.float32)
    p['be2'] = jnp.zeros((1, S), jnp.float32)
    p['w3'] = unif(next(k), (1, S), S)
    p['b3'] = unif(next(k), (1, 1), S)
    return p


@jax.jit
def forward(x, weights, h0, c0):
    # All shape params are concrete Python ints at trace time.
    N, L, S = x.shape
    layer_num, _, H = h0.shape
    P, G = layer_num, 4 * H

    # Wrapper-side, loop-invariant layout plumbing.
    x2d = jnp.transpose(x, (1, 0, 2)).reshape(L * N, S)      # time-major slab

    w1t = weights['w1'].T.astype(MATMUL_DTYPE)               # (S, S)
    wih0t = weights['wih0'].T.astype(MATMUL_DTYPE)           # (S, 4H)
    w2t = weights['w2'].T.astype(MATMUL_DTYPE)               # (H, S)

    # Stacked block weight for the single fused per-step MXU call.
    #   column block l:
    #     l == 0 : rows 0:H          = Whh0^T
    #     l >= 1 : rows (l-1)H:lH    = Wih_l^T   (input projection folded in)
    #              rows lH:(l+1)H    = Whh_l^T
    recw = jnp.zeros((P * H, P * G), jnp.float32)
    recw = recw.at[0:H, 0:G].set(weights['whh0'].T)
    for l in range(1, P):
        recw = recw.at[(l - 1) * H:l * H, l * G:(l + 1) * G].set(weights[f'wih{l}'].T)
        recw = recw.at[l * H:(l + 1) * H, l * G:(l + 1) * G].set(weights[f'whh{l}'].T)
    recw = recw.astype(MATMUL_DTYPE)

    lstm_bias = jnp.concatenate(
        [weights[f'bih{l}'] + weights[f'bhh{l}'] for l in range(P)], axis=0)
    small = jnp.concatenate([
        weights['b1'], weights['g1'], weights['be1'],
        weights['b2'], weights['g2'], weights['be2'],
        weights['w3'], jnp.pad(weights['b3'], ((0, 0), (0, S - 1)))], axis=0)

    inputs = [x2d, w1t, wih0t, recw, lstm_bias, w2t, small, h0, c0]

    kernel = _make_kernel(P, N, L, S, H)
    vmem = pl.BlockSpec(memory_space=pltpu.MemorySpace.VMEM)
    out_row, hn, cn = pl.pallas_call(
        kernel,
        out_shape=(
            jax.ShapeDtypeStruct((1, L * N), jnp.float32),
            jax.ShapeDtypeStruct((P, N, H), jnp.float32),
            jax.ShapeDtypeStruct((P, N, H), jnp.float32),
        ),
        in_specs=[vmem] * len(inputs),
        out_specs=(vmem, vmem, vmem),
        input_output_aliases={7: 1, 8: 2},   # h0 -> hn, c0 -> cn (in-place state)
    )(*inputs)

    out = out_row.reshape(L, N).T                            # (N, L)
    return out, (hn, cn)


def run(x, p, hx=None):
    N, L, S = x.shape
    H, layer_num = p['H'], p['layer_num']
    if hx is None:
        h0 = jnp.zeros((layer_num, N, H), jnp.float32)
        c0 = jnp.zeros((layer_num, N, H), jnp.float32)
    else:
        h0, c0 = hx
    weights = {k: v for k, v in p.items() if not isinstance(v, int)}
    return forward(x, weights, h0, c0)


def reference(x, p, hx=None):
    """Pure-JAX mirror of the PyTorch forward (training-mode BatchNorm)."""
    N, L, S = x.shape
    H, layer_num = p['H'], p['layer_num']
    h = jnp.einsum('nls,os->nlo', x, p['w1']) + p['b1']
    m = h.mean(axis=(0, 1), keepdims=True)
    v = ((h - m) ** 2).mean(axis=(0, 1), keepdims=True)
    h = jnp.tanh(((h - m) / jnp.sqrt(v + EPS)) * p['g1'] + p['be1'])
    if hx is None:
        h0 = jnp.zeros((layer_num, N, H)); c0 = jnp.zeros((layer_num, N, H))
    else:
        h0, c0 = hx
    seq = h
    hns, cns = [], []
    for l in range(layer_num):
        ht, ct = h0[l], c0[l]
        outs = []
        for t in range(L):
            g = (seq[:, t, :] @ p[f'wih{l}'].T + ht @ p[f'whh{l}'].T
                 + p[f'bih{l}'] + p[f'bhh{l}'])
            i_g = jax.nn.sigmoid(g[:, :H]); f_g = jax.nn.sigmoid(g[:, H:2 * H])
            g_g = jnp.tanh(g[:, 2 * H:3 * H]); o_g = jax.nn.sigmoid(g[:, 3 * H:])
            ct = f_g * ct + i_g * g_g
            ht = o_g * jnp.tanh(ct)
            outs.append(ht)
        seq = jnp.stack(outs, axis=1)
        hns.append(ht); cns.append(ct)
    y = jnp.einsum('nlh,sh->nls', seq, p['w2']) + p['b2']
    m2 = y.mean(axis=(0, 1), keepdims=True)
    v2 = ((y - m2) ** 2).mean(axis=(0, 1), keepdims=True)
    y = jnp.tanh(((y - m2) / jnp.sqrt(v2 + EPS)) * p['g2'] + p['be2'])
    out = (jnp.einsum('nls,os->nlo', y, p['w3']) + p['b3'])[:, :, 0]
    return out, (jnp.stack(hns, 0), jnp.stack(cns, 0))


if __name__ == "__main__":
    N, L = 2, 8              # batch, sequence length
    S, H, LAYERS = 4, 32, 2  # state_channels, hidden_size, layer_num

    key = jax.random.PRNGKey(0)
    kx, kp = jax.random.split(key)
    x = jax.random.normal(kx, (N, L, S), jnp.float32)
    params = init_params(kp, S, H, LAYERS)

    (out, (hn, cn)) = run(x, params)
    jax.block_until_ready((out, hn, cn))

    ref_out, (ref_hn, ref_cn) = reference(x, params)
    np.testing.assert_allclose(np.asarray(out), np.asarray(ref_out), rtol=1e-3, atol=1e-3)
    np.testing.assert_allclose(np.asarray(hn), np.asarray(ref_hn), rtol=1e-3, atol=1e-3)
    np.testing.assert_allclose(np.asarray(cn), np.asarray(ref_cn), rtol=1e-3, atol=1e-3)

    print("KERNEL_OK")
</pallas_src>

<mosaic_0001>
module attributes {stable_mosaic.version = 11 : i64} {
  func.func @kernel(%arg0: memref<16x4xf32, #tpu.memory_space<vmem>>, %arg1: memref<4x4xf32, #tpu.memory_space<vmem>>, %arg2: memref<4x128xf32, #tpu.memory_space<vmem>>, %arg3: memref<64x256xf32, #tpu.memory_space<vmem>>, %arg4: memref<2x128xf32, #tpu.memory_space<vmem>>, %arg5: memref<32x4xf32, #tpu.memory_space<vmem>>, %arg6: memref<8x4xf32, #tpu.memory_space<vmem>>, %arg7: memref<2x2x32xf32, #tpu.memory_space<vmem>>, %arg8: memref<2x2x32xf32, #tpu.memory_space<vmem>>, %arg9: memref<1x16xf32, #tpu.memory_space<vmem>>, %arg10: memref<2x2x32xf32, #tpu.memory_space<vmem>>, %arg11: memref<2x2x32xf32, #tpu.memory_space<vmem>>) attributes {dimension_semantics = [], scalar_prefetch = 0 : i64, scratch_operands = 0 : i64, tpu.core_type = #tpu.core_type<tc>} {
    %c0 = arith.constant 0 : index
    %c0_0 = arith.constant 0 : index
    %0 = vector.load %arg0[%c0, %c0_0] : memref<16x4xf32, #tpu.memory_space<vmem>>, vector<16x4xf32>
    %c0_1 = arith.constant 0 : index
    %c0_2 = arith.constant 0 : index
    %1 = vector.load %arg6[%c0_1, %c0_2] : memref<8x4xf32, #tpu.memory_space<vmem>>, vector<1x4xf32>
    %c1 = arith.constant 1 : index
    %c0_3 = arith.constant 0 : index
    %2 = vector.load %arg6[%c1, %c0_3] : memref<8x4xf32, #tpu.memory_space<vmem>>, vector<1x4xf32>
    %c2 = arith.constant 2 : index
    %c0_4 = arith.constant 0 : index
    %3 = vector.load %arg6[%c2, %c0_4] : memref<8x4xf32, #tpu.memory_space<vmem>>, vector<1x4xf32>
    %c0_5 = arith.constant 0 : index
    %c0_6 = arith.constant 0 : index
    %4 = vector.load %arg1[%c0_5, %c0_6] : memref<4x4xf32, #tpu.memory_space<vmem>>, vector<4x4xf32>
    %cst = arith.constant dense<0.000000e+00> : vector<16x4xf32>
    %5 = tpu.matmul %0, %4, %cst {dimension_numbers = #tpu.dot_dimension_numbers<[1], [0], [0], [1], [0, 0, 1, 1], [], []>} : vector<16x4xf32>, vector<4x4xf32>, vector<16x4xf32> -> vector<16x4xf32>
    %6 = vector.broadcast %1 : vector<1x4xf32> to vector<16x4xf32>
    %7 = arith.addf %5, %6 : vector<16x4xf32>
    %cst_7 = arith.constant dense<0.000000e+00> : vector<4xf32>
    %8 = vector.multi_reduction <add>, %7, %cst_7 [0] : vector<16x4xf32> to vector<4xf32>
    %9 = vector.shape_cast %8 : vector<4xf32> to vector<1x4xf32>
    %cst_8 = arith.constant 1.600000e+01 : f32
    %10 = vector.broadcast %cst_8 : f32 to vector<1x4xf32>
    %11 = arith.divf %9, %10 : vector<1x4xf32>
    %12 = vector.broadcast %11 : vector<1x4xf32> to vector<16x4xf32>
    %13 = arith.subf %7, %12 : vector<16x4xf32>
    %14 = arith.mulf %13, %13 : vector<16x4xf32>
    %cst_9 = arith.constant dense<0.000000e+00> : vector<4xf32>
    %15 = vector.multi_reduction <add>, %14, %cst_9 [0] : vector<16x4xf32> to vector<4xf32>
    %16 = vector.shape_cast %15 : vector<4xf32> to vector<1x4xf32>
    %cst_10 = arith.constant 1.600000e+01 : f32
    %17 = vector.broadcast %cst_10 : f32 to vector<1x4xf32>
    %18 = arith.divf %16, %17 : vector<1x4xf32>
    %19 = vector.broadcast %11 : vector<1x4xf32> to vector<16x4xf32>
    %20 = arith.subf %7, %19 : vector<16x4xf32>
    %cst_11 = arith.constant 9.99999974E-6 : f32
    %21 = vector.broadcast %cst_11 : f32 to vector<1x4xf32>
    %22 = arith.addf %18, %21 : vector<1x4xf32>
    %23 = math.rsqrt %22 : vector<1x4xf32>
    %24 = vector.broadcast %23 : vector<1x4xf32> to vector<16x4xf32>
    %25 = arith.mulf %20, %24 : vector<16x4xf32>
    %26 = vector.broadcast %2 : vector<1x4xf32> to vector<16x4xf32>
    %27 = arith.mulf %25, %26 : vector<16x4xf32>
    %28 = vector.broadcast %3 : vector<1x4xf32> to vector<16x4xf32>
    %29 = arith.addf %27, %28 : vector<16x4xf32>
    %30 = math.tanh %29 : vector<16x4xf32>
    %c0_12 = arith.constant 0 : index
    %c0_13 = arith.constant 0 : index
    %31 = vector.load %arg2[%c0_12, %c0_13] : memref<4x128xf32, #tpu.memory_space<vmem>>, vector<4x128xf32>
    %cst_14 = arith.constant dense<0.000000e+00> : vector<16x128xf32>
    %32 = tpu.matmul %30, %31, %cst_14 {dimension_numbers = #tpu.dot_dimension_numbers<[1], [0], [0], [1], [0, 0, 1, 1], [], []>} : vector<16x4xf32>, vector<4x128xf32>, vector<16x128xf32> -> vector<16x128xf32>
    %c0_15 = arith.constant 0 : index
    %c0_16 = arith.constant 0 : index
    %33 = vector.load %arg4[%c0_15, %c0_16] : memref<2x128xf32, #tpu.memory_space<vmem>>, vector<1x128xf32>
    %34 = vector.broadcast %33 : vector<1x128xf32> to vector<16x128xf32>
    %35 = arith.addf %32, %34 : vector<16x128xf32>
    %c0_17 = arith.constant 0 : index
    %c0_18 = arith.constant 0 : index
    %36 = vector.load %arg3[%c0_17, %c0_18] : memref<64x256xf32, #tpu.memory_space<vmem>>, vector<64x256xf32>
    %c1_19 = arith.constant 1 : index
    %c0_20 = arith.constant 0 : index
    %37 = vector.load %arg4[%c1_19, %c0_20] : memref<2x128xf32, #tpu.memory_space<vmem>>, vector<1x128xf32>
    %c0_21 = arith.constant 0 : index
    %c0_22 = arith.constant 0 : index
    %c0_23 = arith.constant 0 : index
    %38 = vector.load %arg7[%c0_21, %c0_22, %c0_23] : memref<2x2x32xf32, #tpu.memory_space<vmem>>, vector<1x2x32xf32>
    %39 = vector.shape_cast %38 : vector<1x2x32xf32> to vector<2x32xf32>
    %c1_24 = arith.constant 1 : index
    %c0_25 = arith.constant 0 : index
    %c0_26 = arith.constant 0 : index
    %40 = vector.load %arg7[%c1_24, %c0_25, %c0_26] : memref<2x2x32xf32, #tpu.memory_space<vmem>>, vector<1x2x32xf32>
    %41 = vector.shape_cast %40 : vector<1x2x32xf32> to vector<2x32xf32>
    %c0_27 = arith.constant 0 : index
    %c0_28 = arith.constant 0 : index
    %c0_29 = arith.constant 0 : index
    %42 = vector.load %arg8[%c0_27, %c0_28, %c0_29] : memref<2x2x32xf32, #tpu.memory_space<vmem>>, vector<1x2x32xf32>
    %43 = vector.shape_cast %42 : vector<1x2x32xf32> to vector<2x32xf32>
    %c1_30 = arith.constant 1 : index
    %c0_31 = arith.constant 0 : index
    %c0_32 = arith.constant 0 : index
    %44 = vector.load %arg8[%c1_30, %c0_31, %c0_32] : memref<2x2x32xf32, #tpu.memory_space<vmem>>, vector<1x2x32xf32>
    %45 = vector.shape_cast %44 : vector<1x2x32xf32> to vector<2x32xf32>
    %46 = tpu.concatenate %39, %41 in 1 : vector<2x32xf32>, vector<2x32xf32> -> vector<2x64xf32>
    %cst_33 = arith.constant dense<0.000000e+00> : vector<2x256xf32>
    %47 = tpu.matmul %46, %36, %cst_33 {dimension_numbers = #tpu.dot_dimension_numbers<[1], [0], [0], [1], [0, 0, 1, 1], [], []>} : vector<2x64xf32>, vector<64x256xf32>, vector<2x256xf32> -> vector<2x256xf32>
    %48 = vector.extract_strided_slice %47 {offsets = [0, 0], sizes = [2, 128], strides = [1, 1]} : vector<2x256xf32> to vector<2x128xf32>
    %49 = vector.extract_strided_slice %35 {offsets = [0, 0], sizes = [2, 128], strides = [1, 1]} : vector<16x128xf32> to vector<2x128xf32>
    %50 = arith.addf %48, %49 : vector<2x128xf32>
    %51 = arith.negf %50 : vector<2x128xf32>
    %52 = math.exp %51 : vector<2x128xf32>
    %cst_34 = arith.constant 1.000000e+00 : f32
    %53 = vector.broadcast %cst_34 : f32 to vector<2x128xf32>
    %54 = arith.addf %53, %52 : vector<2x128xf32>
    %55 = arith.divf %53, %54 : vector<2x128xf32>
    %56 = math.tanh %50 : vector<2x128xf32>
    %57 = vector.extract_strided_slice %55 {offsets = [0, 0], sizes = [2, 32], strides = [1, 1]} : vector<2x128xf32> to vector<2x32xf32>
    %58 = vector.extract_strided_slice %55 {offsets = [0, 32], sizes = [2, 32], strides = [1, 1]} : vector<2x128xf32> to vector<2x32xf32>
    %59 = vector.extract_strided_slice %56 {offsets = [0, 64], sizes = [2, 32], strides = [1, 1]} : vector<2x128xf32> to vector<2x32xf32>
    %60 = vector.extract_strided_slice %55 {offsets = [0, 96], sizes = [2, 32], strides = [1, 1]} : vector<2x128xf32> to vector<2x32xf32>
    %61 = arith.mulf %58, %43 : vector<2x32xf32>
    %62 = arith.mulf %57, %59 : vector<2x32xf32>
    %63 = arith.addf %61, %62 : vector<2x32xf32>
    %64 = math.tanh %63 : vector<2x32xf32>
    %65 = arith.mulf %60, %64 : vector<2x32xf32>
    %66 = tpu.concatenate %65, %41 in 1 : vector<2x32xf32>, vector<2x32xf32> -> vector<2x64xf32>
    %cst_35 = arith.constant dense<0.000000e+00> : vector<2x256xf32>
    %67 = tpu.matmul %66, %36, %cst_35 {dimension_numbers = #tpu.dot_dimension_numbers<[1], [0], [0], [1], [0, 0, 1, 1], [], []>} : vector<2x64xf32>, vector<64x256xf32>, vector<2x256xf32> -> vector<2x256xf32>
    %68 = vector.extract_strided_slice %67 {offsets = [0, 0], sizes = [2, 128], strides = [1, 1]} : vector<2x256xf32> to vector<2x128xf32>
    %69 = vector.extract_strided_slice %35 {offsets = [2, 0], sizes = [2, 128], strides = [1, 1]} : vector<16x128xf32> to vector<2x128xf32>
    %70 = arith.addf %68, %69 : vector<2x128xf32>
    %71 = arith.negf %70 : vector<2x128xf32>
    %72 = math.exp %71 : vector<2x128xf32>
    %cst_36 = arith.constant 1.000000e+00 : f32
    %73 = vector.broadcast %cst_36 : f32 to vector<2x128xf32>
    %74 = arith.addf %73, %72 : vector<2x128xf32>
    %75 = arith.divf %73, %74 : vector<2x128xf32>
    %76 = math.tanh %70 : vector<2x128xf32>
    %77 = vector.extract_strided_slice %75 {offsets = [0, 0], sizes = [2, 32], strides = [1, 1]} : vector<2x128xf32> to vector<2x32xf32>
    %78 = vector.extract_strided_slice %75 {offsets = [0, 32], sizes = [2, 32], strides = [1, 1]} : vector<2x128xf32> to vector<2x32xf32>
    %79 = vector.extract_strided_slice %76 {offsets = [0, 64], sizes = [2, 32], strides = [1, 1]} : vector<2x128xf32> to vector<2x32xf32>
    %80 = vector.extract_strided_slice %75 {offsets = [0, 96], sizes = [2, 32], strides = [1, 1]} : vector<2x128xf32> to vector<2x32xf32>
    %81 = arith.mulf %78, %63 : vector<2x32xf32>
    %82 = arith.mulf %77, %79 : vector<2x32xf32>
    %83 = arith.addf %81, %82 : vector<2x32xf32>
    %84 = math.tanh %83 : vector<2x32xf32>
    %85 = arith.mulf %80, %84 : vector<2x32xf32>
    %86 = vector.extract_strided_slice %67 {offsets = [0, 128], sizes = [2, 128], strides = [1, 1]} : vector<2x256xf32> to vector<2x128xf32>
    %87 = vector.broadcast %37 : vector<1x128xf32> to vector<2x128xf32>
    %88 = arith.addf %86, %87 : vector<2x128xf32>
    %89 = arith.negf %88 : vector<2x128xf32>
    %90 = math.exp %89 : vector<2x128xf32>
    %cst_37 = arith.constant 1.000000e+00 : f32
    %91 = vector.broadcast %cst_37 : f32 to vector<2x128xf32>
    %92 = arith.addf %91, %90 : vector<2x128xf32>
    %93 = arith.divf %91, %92 : vector<2x128xf32>
    %94 = math.tanh %88 : vector<2x128xf32>
    %95 = vector.extract_strided_slice %93 {offsets = [0, 0], sizes = [2, 32], strides = [1, 1]} : vector<2x128xf32> to vector<2x32xf32>
    %96 = vector.extract_strided_slice %93 {offsets = [0, 32], sizes = [2, 32], strides = [1, 1]} : vector<2x128xf32> to vector<2x32xf32>
    %97 = vector.extract_strided_slice %94 {offsets = [0, 64], sizes = [2, 32], strides = [1, 1]} : vector<2x128xf32> to vector<2x32xf32>
    %98 = vector.extract_strided_slice %93 {offsets = [0, 96], sizes = [2, 32], strides = [1, 1]} : vector<2x128xf32> to vector<2x32xf32>
    %99 = arith.mulf %96, %45 : vector<2x32xf32>
    %100 = arith.mulf %95, %97 : vector<2x32xf32>
    %101 = arith.addf %99, %100 : vector<2x32xf32>
    %102 = math.tanh %101 : vector<2x32xf32>
    %103 = arith.mulf %98, %102 : vector<2x32xf32>
    %104 = tpu.concatenate %85, %103 in 1 : vector<2x32xf32>, vector<2x32xf32> -> vector<2x64xf32>
    %cst_38 = arith.constant dense<0.000000e+00> : vector<2x256xf32>
    %105 = tpu.matmul %104, %36, %cst_38 {dimension_numbers = #tpu.dot_dimension_numbers<[1], [0], [0], [1], [0, 0, 1, 1], [], []>} : vector<2x64xf32>, vector<64x256xf32>, vector<2x256xf32> -> vector<2x256xf32>
    %106 = vector.extract_strided_slice %105 {offsets = [0, 0], sizes = [2, 128], strides = [1, 1]} : vector<2x256xf32> to vector<2x128xf32>
    %107 = vector.extract_strided_slice %35 {offsets = [4, 0], sizes = [2, 128], strides = [1, 1]} : vector<16x128xf32> to vector<2x128xf32>
    %108 = arith.addf %106, %107 : vector<2x128xf32>
    %109 = arith.negf %108 : vector<2x128xf32>
    %110 = math.exp %109 : vector<2x128xf32>
    %cst_39 = arith.constant 1.000000e+00 : f32
    %111 = vector.broadcast %cst_39 : f32 to vector<2x128xf32>
    %112 = arith.addf %111, %110 : vector<2x128xf32>
    %113 = arith.divf %111, %112 : vector<2x128xf32>
    %114 = math.tanh %108 : vector<2x128xf32>
    %115 = vector.extract_strided_slice %113 {offsets = [0, 0], sizes = [2, 32], strides = [1, 1]} : vector<2x128xf32> to vector<2x32xf32>
    %116 = vector.extract_strided_slice %113 {offsets = [0, 32], sizes = [2, 32], strides = [1, 1]} : vector<2x128xf32> to vector<2x32xf32>
    %117 = vector.extract_strided_slice %114 {offsets = [0, 64], sizes = [2, 32], strides = [1, 1]} : vector<2x128xf32> to vector<2x32xf32>
    %118 = vector.extract_strided_slice %113 {offsets = [0, 96], sizes = [2, 32], strides = [1, 1]} : vector<2x128xf32> to vector<2x32xf32>
    %119 = arith.mulf %116, %83 : vector<2x32xf32>
    %120 = arith.mulf %115, %117 : vector<2x32xf32>
    %121 = arith.addf %119, %120 : vector<2x32xf32>
    %122 = math.tanh %121 : vector<2x32xf32>
    %123 = arith.mulf %118, %122 : vector<2x32xf32>
    %124 = vector.extract_strided_slice %105 {offsets = [0, 128], sizes = [2, 128], strides = [1, 1]} : vector<2x256xf32> to vector<2x128xf32>
    %125 = vector.broadcast %37 : vector<1x128xf32> to vector<2x128xf32>
    %126 = arith.addf %124, %125 : vector<2x128xf32>
    %127 = arith.negf %126 : vector<2x128xf32>
    %128 = math.exp %127 : vector<2x128xf32>
    %cst_40 = arith.constant 1.000000e+00 : f32
    %129 = vector.broadcast %cst_40 : f32 to vector<2x128xf32>
    %130 = arith.addf %129, %128 : vector<2x128xf32>
    %131 = arith.divf %129, %130 : vector<2x128xf32>
    %132 = math.tanh %126 : vector<2x128xf32>
    %133 = vector.extract_strided_slice %131 {offsets = [0, 0], sizes = [2, 32], strides = [1, 1]} : vector<2x128xf32> to vector<2x32xf32>
    %134 = vector.extract_strided_slice %131 {offsets = [0, 32], sizes = [2, 32], strides = [1, 1]} : vector<2x128xf32> to vector<2x32xf32>
    %135 = vector.extract_strided_slice %132 {offsets = [0, 64], sizes = [2, 32], strides = [1, 1]} : vector<2x128xf32> to vector<2x32xf32>
    %136 = vector.extract_strided_slice %131 {offsets = [0, 96], sizes = [2, 32], strides = [1, 1]} : vector<2x128xf32> to vector<2x32xf32>
    %137 = arith.mulf %134, %101 : vector<2x32xf32>
    %138 = arith.mulf %133, %135 : vector<2x32xf32>
    %139 = arith.addf %137, %138 : vector<2x32xf32>
    %140 = math.tanh %139 : vector<2x32xf32>
    %141 = arith.mulf %136, %140 : vector<2x32xf32>
    %142 = tpu.concatenate %123, %141 in 1 : vector<2x32xf32>, vector<2x32xf32> -> vector<2x64xf32>
    %cst_41 = arith.constant dense<0.000000e+00> : vector<2x256xf32>
    %143 = tpu.matmul %142, %36, %cst_41 {dimension_numbers = #tpu.dot_dimension_numbers<[1], [0], [0], [1], [0, 0, 1, 1], [], []>} : vector<2x64xf32>, vector<64x256xf32>, vector<2x256xf32> -> vector<2x256xf32>
    %144 = vector.extract_strided_slice %143 {offsets = [0, 0], sizes = [2, 128], strides = [1, 1]} : vector<2x256xf32> to vector<2x128xf32>
    %145 = vector.extract_strided_slice %35 {offsets = [6, 0], sizes = [2, 128], strides = [1, 1]} : vector<16x128xf32> to vector<2x128xf32>
    %146 = arith.addf %144, %145 : vector<2x128xf32>
    %147 = arith.negf %146 : vector<2x128xf32>
    %148 = math.exp %147 : vector<2x128xf32>
    %cst_42 = arith.constant 1.000000e+00 : f32
    %149 = vector.broadcast %cst_42 : f32 to vector<2x128xf32>
    %150 = arith.addf %149, %148 : vector<2x128xf32>
    %151 = arith.divf %149, %150 : vector<2x128xf32>
    %152 = math.tanh %146 : vector<2x128xf32>
    %153 = vector.extract_strided_slice %151 {offsets = [0, 0], sizes = [2, 32], strides = [1, 1]} : vector<2x128xf32> to vector<2x32xf32>
    %154 = vector.extract_strided_slice %151 {offsets = [0, 32], sizes = [2, 32], strides = [1, 1]} : vector<2x128xf32> to vector<2x32xf32>
    %155 = vector.extract_strided_slice %152 {offsets = [0, 64], sizes = [2, 32], strides = [1, 1]} : vector<2x128xf32> to vector<2x32xf32>
    %156 = vector.extract_strided_slice %151 {offsets = [0, 96], sizes = [2, 32], strides = [1, 1]} : vector<2x128xf32> to vector<2x32xf32>
    %157 = arith.mulf %154, %121 : vector<2x32xf32>
    %158 = arith.mulf %153, %155 : vector<2x32xf32>
    %159 = arith.addf %157, %158 : vector<2x32xf32>
    %160 = math.tanh %159 : vector<2x32xf32>
    %161 = arith.mulf %156, %160 : vector<2x32xf32>
    %162 = vector.extract_strided_slice %143 {offsets = [0, 128], sizes = [2, 128], strides = [1, 1]} : vector<2x256xf32> to vector<2x128xf32>
    %163 = vector.broadcast %37 : vector<1x128xf32> to vector<2x128xf32>
    %164 = arith.addf %162, %163 : vector<2x128xf32>
    %165 = arith.negf %164 : vector<2x128xf32>
    %166 = math.exp %165 : vector<2x128xf32>
    %cst_43 = arith.constant 1.000000e+00 : f32
    %167 = vector.broadcast %cst_43 : f32 to vector<2x128xf32>
    %168 = arith.addf %167, %166 : vector<2x128xf32>
    %169 = arith.divf %167, %168 : vector<2x128xf32>
    %170 = math.tanh %164 : vector<2x128xf32>
    %171 = vector.extract_strided_slice %169 {offsets = [0, 0], sizes = [2, 32], strides = [1, 1]} : vector<2x128xf32> to vector<2x32xf32>
    %172 = vector.extract_strided_slice %169 {offsets = [0, 32], sizes = [2, 32], strides = [1, 1]} : vector<2x128xf32> to vector<2x32xf32>
    %173 = vector.extract_strided_slice %170 {offsets = [0, 64], sizes = [2, 32], strides = [1, 1]} : vector<2x128xf32> to vector<2x32xf32>
    %174 = vector.extract_strided_slice %169 {offsets = [0, 96], sizes = [2, 32], strides = [1, 1]} : vector<2x128xf32> to vector<2x32xf32>
    %175 = arith.mulf %172, %139 : vector<2x32xf32>
    %176 = arith.mulf %171, %173 : vector<2x32xf32>
    %177 = arith.addf %175, %176 : vector<2x32xf32>
    %178 = math.tanh %177 : vector<2x32xf32>
    %179 = arith.mulf %174, %178 : vector<2x32xf32>
    %180 = tpu.concatenate %161, %179 in 1 : vector<2x32xf32>, vector<2x32xf32> -> vector<2x64xf32>
    %cst_44 = arith.constant dense<0.000000e+00> : vector<2x256xf32>
    %181 = tpu.matmul %180, %36, %cst_44 {dimension_numbers = #tpu.dot_dimension_numbers<[1], [0], [0], [1], [0, 0, 1, 1], [], []>} : vector<2x64xf32>, vector<64x256xf32>, vector<2x256xf32> -> vector<2x256xf32>
    %182 = vector.extract_strided_slice %181 {offsets = [0, 0], sizes = [2, 128], strides = [1, 1]} : vector<2x256xf32> to vector<2x128xf32>
    %183 = vector.extract_strided_slice %35 {offsets = [8, 0], sizes = [2, 128], strides = [1, 1]} : vector<16x128xf32> to vector<2x128xf32>
    %184 = arith.addf %182, %183 : vector<2x128xf32>
    %185 = arith.negf %184 : vector<2x128xf32>
    %186 = math.exp %185 : vector<2x128xf32>
    %cst_45 = arith.constant 1.000000e+00 : f32
    %187 = vector.broadcast %cst_45 : f32 to vector<2x128xf32>
    %188 = arith.addf %187, %186 : vector<2x128xf32>
    %189 = arith.divf %187, %188 : vector<2x128xf32>
    %190 = math.tanh %184 : vector<2x128xf32>
    %191 = vector.extract_strided_slice %189 {offsets = [0, 0], sizes = [2, 32], strides = [1, 1]} : vector<2x128xf32> to vector<2x32xf32>
    %192 = vector.extract_strided_slice %189 {offsets = [0, 32], sizes = [2, 32], strides = [1, 1]} : vector<2x128xf32> to vector<2x32xf32>
    %193 = vector.extract_strided_slice %190 {offsets = [0, 64], sizes = [2, 32], strides = [1, 1]} : vector<2x128xf32> to vector<2x32xf32>
    %194 = vector.extract_strided_slice %189 {offsets = [0, 96], sizes = [2, 32], strides = [1, 1]} : vector<2x128xf32> to vector<2x32xf32>
    %195 = arith.mulf %192, %159 : vector<2x32xf32>
    %196 = arith.mulf %191, %193 : vector<2x32xf32>
    %197 = arith.addf %195, %196 : vector<2x32xf32>
    %198 = math.tanh %197 : vector<2x32xf32>
    %199 = arith.mulf %194, %198 : vector<2x32xf32>
    %200 = vector.extract_strided_slice %181 {offsets = [0, 128], sizes = [2, 128], strides = [1, 1]} : vector<2x256xf32> to vector<2x128xf32>
    %201 = vector.broadcast %37 : vector<1x128xf32> to vector<2x128xf32>
    %202 = arith.addf %200, %201 : vector<2x128xf32>
    %203 = arith.negf %202 : vector<2x128xf32>
    %204 = math.exp %203 : vector<2x128xf32>
    %cst_46 = arith.constant 1.000000e+00 : f32
    %205 = vector.broadcast %cst_46 : f32 to vector<2x128xf32>
    %206 = arith.addf %205, %204 : vector<2x128xf32>
    %207 = arith.divf %205, %206 : vector<2x128xf32>
    %208 = math.tanh %202 : vector<2x128xf32>
    %209 = vector.extract_strided_slice %207 {offsets = [0, 0], sizes = [2, 32], strides = [1, 1]} : vector<2x128xf32> to vector<2x32xf32>
    %210 = vector.extract_strided_slice %207 {offsets = [0, 32], sizes = [2, 32], strides = [1, 1]} : vector<2x128xf32> to vector<2x32xf32>
    %211 = vector.extract_strided_slice %208 {offsets = [0, 64], sizes = [2, 32], strides = [1, 1]} : vector<2x128xf32> to vector<2x32xf32>
    %212 = vector.extract_strided_slice %207 {offsets = [0, 96], sizes = [2, 32], strides = [1, 1]} : vector<2x128xf32> to vector<2x32xf32>
    %213 = arith.mulf %210, %177 : vector<2x32xf32>
    %214 = arith.mulf %209, %211 : vector<2x32xf32>
    %215 = arith.addf %213, %214 : vector<2x32xf32>
    %216 = math.tanh %215 : vector<2x32xf32>
    %217 = arith.mulf %212, %216 : vector<2x32xf32>
    %218 = tpu.concatenate %199, %217 in 1 : vector<2x32xf32>, vector<2x32xf32> -> vector<2x64xf32>
    %cst_47 = arith.constant dense<0.000000e+00> : vector<2x256xf32>
    %219 = tpu.matmul %218, %36, %cst_47 {dimension_numbers = #tpu.dot_dimension_numbers<[1], [0], [0], [1], [0, 0, 1, 1], [], []>} : vector<2x64xf32>, vector<64x256xf32>, vector<2x256xf32> -> vector<2x256xf32>
    %220 = vector.extract_strided_slice %219 {offsets = [0, 0], sizes = [2, 128], strides = [1, 1]} : vector<2x256xf32> to vector<2x128xf32>
    %221 = vector.extract_strided_slice %35 {offsets = [10, 0], sizes = [2, 128], strides = [1, 1]} : vector<16x128xf32> to vector<2x128xf32>
    %222 = arith.addf %220, %221 : vector<2x128xf32>
    %223 = arith.negf %222 : vector<2x128xf32>
    %224 = math.exp %223 : vector<2x128xf32>
    %cst_48 = arith.constant 1.000000e+00 : f32
    %225 = vector.broadcast %cst_48 : f32 to vector<2x128xf32>
    %226 = arith.addf %225, %224 : vector<2x128xf32>
    %227 = arith.divf %225, %226 : vector<2x128xf32>
    %228 = math.tanh %222 : vector<2x128xf32>
    %229 = vector.extract_strided_slice %227 {offsets = [0, 0], sizes = [2, 32], strides = [1, 1]} : vector<2x128xf32> to vector<2x32xf32>
    %230 = vector.extract_strided_slice %227 {offsets = [0, 32], sizes = [2, 32], strides = [1, 1]} : vector<2x128xf32> to vector<2x32xf32>
    %231 = vector.extract_strided_slice %228 {offsets = [0, 64], sizes = [2, 32], strides = [1, 1]} : vector<2x128xf32> to vector<2x32xf32>
    %232 = vector.extract_strided_slice %227 {offsets = [0, 96], sizes = [2, 32], strides = [1, 1]} : vector<2x128xf32> to vector<2x32xf32>
    %233 = arith.mulf %230, %197 : vector<2x32xf32>
    %234 = arith.mulf %229, %231 : vector<2x32xf32>
    %235 = arith.addf %233, %234 : vector<2x32xf32>
    %236 = math.tanh %235 : vector<2x32xf32>
    %237 = arith.mulf %232, %236 : vector<2x32xf32>
    %238 = vector.extract_strided_slice %219 {offsets = [0, 128], sizes = [2, 128], strides = [1, 1]} : vector<2x256xf32> to vector<2x128xf32>
    %239 = vector.broadcast %37 : vector<1x128xf32> to vector<2x128xf32>
    %240 = arith.addf %238, %239 : vector<2x128xf32>
    %241 = arith.negf %240 : vector<2x128xf32>
    %242 = math.exp %241 : vector<2x128xf32>
    %cst_49 = arith.constant 1.000000e+00 : f32
    %243 = vector.broadcast %cst_49 : f32 to vector<2x128xf32>
    %244 = arith.addf %243, %242 : vector<2x128xf32>
    %245 = arith.divf %243, %244 : vector<2x128xf32>
    %246 = math.tanh %240 : vector<2x128xf32>
    %247 = vector.extract_strided_slice %245 {offsets = [0, 0], sizes = [2, 32], strides = [1, 1]} : vector<2x128xf32> to vector<2x32xf32>
    %248 = vector.extract_strided_slice %245 {offsets = [0, 32], sizes = [2, 32], strides = [1, 1]} : vector<2x128xf32> to vector<2x32xf32>
    %249 = vector.extract_strided_slice %246 {offsets = [0, 64], sizes = [2, 32], strides = [1, 1]} : vector<2x128xf32> to vector<2x32xf32>
    %250 = vector.extract_strided_slice %245 {offsets = [0, 96], sizes = [2, 32], strides = [1, 1]} : vector<2x128xf32> to vector<2x32xf32>
    %251 = arith.mulf %248, %215 : vector<2x32xf32>
    %252 = arith.mulf %247, %249 : vector<2x32xf32>
    %253 = arith.addf %251, %252 : vector<2x32xf32>
    %254 = math.tanh %253 : vector<2x32xf32>
    %255 = arith.mulf %250, %254 : vector<2x32xf32>
    %256 = tpu.concatenate %237, %255 in 1 : vector<2x32xf32>, vector<2x32xf32> -> vector<2x64xf32>
    %cst_50 = arith.constant dense<0.000000e+00> : vector<2x256xf32>
    %257 = tpu.matmul %256, %36, %cst_50 {dimension_numbers = #tpu.dot_dimension_numbers<[1], [0], [0], [1], [0, 0, 1, 1], [], []>} : vector<2x64xf32>, vector<64x256xf32>, vector<2x256xf32> -> vector<2x256xf32>
    %258 = vector.extract_strided_slice %257 {offsets = [0, 0], sizes = [2, 128], strides = [1, 1]} : vector<2x256xf32> to vector<2x128xf32>
    %259 = vector.extract_strided_slice %35 {offsets = [12, 0], sizes = [2, 128], strides = [1, 1]} : vector<16x128xf32> to vector<2x128xf32>
    %260 = arith.addf %258, %259 : vector<2x128xf32>
    %261 = arith.negf %260 : vector<2x128xf32>
    %262 = math.exp %261 : vector<2x128xf32>
    %cst_51 = arith.constant 1.000000e+00 : f32
    %263 = vector.broadcast %cst_51 : f32 to vector<2x128xf32>
    %264 = arith.addf %263, %262 : vector<2x128xf32>
    %265 = arith.divf %263, %264 : vector<2x128xf32>
    %266 = math.tanh %260 : vector<2x128xf32>
    %267 = vector.extract_strided_slice %265 {offsets = [0, 0], sizes = [2, 32], strides = [1, 1]} : vector<2x128xf32> to vector<2x32xf32>
    %268 = vector.extract_strided_slice %265 {offsets = [0, 32], sizes = [2, 32], strides = [1, 1]} : vector<2x128xf32> to vector<2x32xf32>
    %269 = vector.extract_strided_slice %266 {offsets = [0, 64], sizes = [2, 32], strides = [1, 1]} : vector<2x128xf32> to vector<2x32xf32>
    %270 = vector.extract_strided_slice %265 {offsets = [0, 96], sizes = [2, 32], strides = [1, 1]} : vector<2x128xf32> to vector<2x32xf32>
    %271 = arith.mulf %268, %235 : vector<2x32xf32>
    %272 = arith.mulf %267, %269 : vector<2x32xf32>
    %273 = arith.addf %271, %272 : vector<2x32xf32>
    %274 = math.tanh %273 : vector<2x32xf32>
    %275 = arith.mulf %270, %274 : vector<2x32xf32>
    %276 = vector.extract_strided_slice %257 {offsets = [0, 128], sizes = [2, 128], strides = [1, 1]} : vector<2x256xf32> to vector<2x128xf32>
    %277 = vector.broadcast %37 : vector<1x128xf32> to vector<2x128xf32>
    %278 = arith.addf %276, %277 : vector<2x128xf32>
    %279 = arith.negf %278 : vector<2x128xf32>
    %280 = math.exp %279 : vector<2x128xf32>
    %cst_52 = arith.constant 1.000000e+00 : f32
    %281 = vector.broadcast %cst_52 : f32 to vector<2x128xf32>
    %282 = arith.addf %281, %280 : vector<2x128xf32>
    %283 = arith.divf %281, %282 : vector<2x128xf32>
    %284 = math.tanh %278 : vector<2x128xf32>
    %285 = vector.extract_strided_slice %283 {offsets = [0, 0], sizes = [2, 32], strides = [1, 1]} : vector<2x128xf32> to vector<2x32xf32>
    %286 = vector.extract_strided_slice %283 {offsets = [0, 32], sizes = [2, 32], strides = [1, 1]} : vector<2x128xf32> to vector<2x32xf32>
    %287 = vector.extract_strided_slice %284 {offsets = [0, 64], sizes = [2, 32], strides = [1, 1]} : vector<2x128xf32> to vector<2x32xf32>
    %288 = vector.extract_strided_slice %283 {offsets = [0, 96], sizes = [2, 32], strides = [1, 1]} : vector<2x128xf32> to vector<2x32xf32>
    %289 = arith.mulf %286, %253 : vector<2x32xf32>
    %290 = arith.mulf %285, %287 : vector<2x32xf32>
    %291 = arith.addf %289, %290 : vector<2x32xf32>
    %292 = math.tanh %291 : vector<2x32xf32>
    %293 = arith.mulf %288, %292 : vector<2x32xf32>
    %294 = tpu.concatenate %275, %293 in 1 : vector<2x32xf32>, vector<2x32xf32> -> vector<2x64xf32>
    %cst_53 = arith.constant dense<0.000000e+00> : vector<2x256xf32>
    %295 = tpu.matmul %294, %36, %cst_53 {dimension_numbers = #tpu.dot_dimension_numbers<[1], [0], [0], [1], [0, 0, 1, 1], [], []>} : vector<2x64xf32>, vector<64x256xf32>, vector<2x256xf32> -> vector<2x256xf32>
    %296 = vector.extract_strided_slice %295 {offsets = [0, 0], sizes = [2, 128], strides = [1, 1]} : vector<2x256xf32> to vector<2x128xf32>
    %297 = vector.extract_strided_slice %35 {offsets = [14, 0], sizes = [2, 128], strides = [1, 1]} : vector<16x128xf32> to vector<2x128xf32>
    %298 = arith.addf %296, %297 : vector<2x128xf32>
    %299 = arith.negf %298 : vector<2x128xf32>
    %300 = math.exp %299 : vector<2x128xf32>
    %cst_54 = arith.constant 1.000000e+00 : f32
    %301 = vector.broadcast %cst_54 : f32 to vector<2x128xf32>
    %302 = arith.addf %301, %300 : vector<2x128xf32>
    %303 = arith.divf %301, %302 : vector<2x128xf32>
    %304 = math.tanh %298 : vector<2x128xf32>
    %305 = vector.extract_strided_slice %303 {offsets = [0, 0], sizes = [2, 32], strides = [1, 1]} : vector<2x128xf32> to vector<2x32xf32>
    %306 = vector.extract_strided_slice %303 {offsets = [0, 32], sizes = [2, 32], strides = [1, 1]} : vector<2x128xf32> to vector<2x32xf32>
    %307 = vector.extract_strided_slice %304 {offsets = [0, 64], sizes = [2, 32], strides = [1, 1]} : vector<2x128xf32> to vector<2x32xf32>
    %308 = vector.extract_strided_slice %303 {offsets = [0, 96], sizes = [2, 32], strides = [1, 1]} : vector<2x128xf32> to vector<2x32xf32>
    %309 = arith.mulf %306, %273 : vector<2x32xf32>
    %310 = arith.mulf %305, %307 : vector<2x32xf32>
    %311 = arith.addf %309, %310 : vector<2x32xf32>
    %312 = math.tanh %311 : vector<2x32xf32>
    %313 = arith.mulf %308, %312 : vector<2x32xf32>
    %314 = vector.extract_strided_slice %295 {offsets = [0, 128], sizes = [2, 128], strides = [1, 1]} : vector<2x256xf32> to vector<2x128xf32>
    %315 = vector.broadcast %37 : vector<1x128xf32> to vector<2x128xf32>
    %316 = arith.addf %314, %315 : vector<2x128xf32>
    %317 = arith.negf %316 : vector<2x128xf32>
    %318 = math.exp %317 : vector<2x128xf32>
    %cst_55 = arith.constant 1.000000e+00 : f32
    %319 = vector.broadcast %cst_55 : f32 to vector<2x128xf32>
    %320 = arith.addf %319, %318 : vector<2x128xf32>
    %321 = arith.divf %319, %320 : vector<2x128xf32>
    %322 = math.tanh %316 : vector<2x128xf32>
    %323 = vector.extract_strided_slice %321 {offsets = [0, 0], sizes = [2, 32], strides = [1, 1]} : vector<2x128xf32> to vector<2x32xf32>
    %324 = vector.extract_strided_slice %321 {offsets = [0, 32], sizes = [2, 32], strides = [1, 1]} : vector<2x128xf32> to vector<2x32xf32>
    %325 = vector.extract_strided_slice %322 {offsets = [0, 64], sizes = [2, 32], strides = [1, 1]} : vector<2x128xf32> to vector<2x32xf32>
    %326 = vector.extract_strided_slice %321 {offsets = [0, 96], sizes = [2, 32], strides = [1, 1]} : vector<2x128xf32> to vector<2x32xf32>
    %327 = arith.mulf %324, %291 : vector<2x32xf32>
    %328 = arith.mulf %323, %325 : vector<2x32xf32>
    %329 = arith.addf %327, %328 : vector<2x32xf32>
    %330 = math.tanh %329 : vector<2x32xf32>
    %331 = arith.mulf %326, %330 : vector<2x32xf32>
    %332 = tpu.concatenate %313, %331 in 1 : vector<2x32xf32>, vector<2x32xf32> -> vector<2x64xf32>
    %cst_56 = arith.constant dense<0.000000e+00> : vector<2x256xf32>
    %333 = tpu.matmul %332, %36, %cst_56 {dimension_numbers = #tpu.dot_dimension_numbers<[1], [0], [0], [1], [0, 0, 1, 1], [], []>} : vector<2x64xf32>, vector<64x256xf32>, vector<2x256xf32> -> vector<2x256xf32>
    %334 = vector.extract_strided_slice %333 {offsets = [0, 128], sizes = [2, 128], strides = [1, 1]} : vector<2x256xf32> to vector<2x128xf32>
    %335 = vector.broadcast %37 : vector<1x128xf32> to vector<2x128xf32>
    %336 = arith.addf %334, %335 : vector<2x128xf32>
    %337 = arith.negf %336 : vector<2x128xf32>
    %338 = math.exp %337 : vector<2x128xf32>
    %cst_57 = arith.constant 1.000000e+00 : f32
    %339 = vector.broadcast %cst_57 : f32 to vector<2x128xf32>
    %340 = arith.addf %339, %338 : vector<2x128xf32>
    %341 = arith.divf %339, %340 : vector<2x128xf32>
    %342 = math.tanh %336 : vector<2x128xf32>
    %343 = vector.extract_strided_slice %341 {offsets = [0, 0], sizes = [2, 32], strides = [1, 1]} : vector<2x128xf32> to vector<2x32xf32>
    %344 = vector.extract_strided_slice %341 {offsets = [0, 32], sizes = [2, 32], strides = [1, 1]} : vector<2x128xf32> to vector<2x32xf32>
    %345 = vector.extract_strided_slice %342 {offsets = [0, 64], sizes = [2, 32], strides = [1, 1]} : vector<2x128xf32> to vector<2x32xf32>
    %346 = vector.extract_strided_slice %341 {offsets = [0, 96], sizes = [2, 32], strides = [1, 1]} : vector<2x128xf32> to vector<2x32xf32>
    %347 = arith.mulf %344, %329 : vector<2x32xf32>
    %348 = arith.mulf %343, %345 : vector<2x32xf32>
    %349 = arith.addf %347, %348 : vector<2x32xf32>
    %350 = math.tanh %349 : vector<2x32xf32>
    %351 = arith.mulf %346, %350 : vector<2x32xf32>
    %c0_58 = arith.constant 0 : index
    %c0_59 = arith.constant 0 : index
    %c0_60 = arith.constant 0 : index
    %352 = vector.load %arg10[%c0_58, %c0_59, %c0_60] : memref<2x2x32xf32, #tpu.memory_space<vmem>>, vector<1x2x32xf32>
    %353 = vector.shape_cast %352 : vector<1x2x32xf32> to vector<2x32xf32>
    %354 = vector.shape_cast %313 : vector<2x32xf32> to vector<1x2x32xf32>
    tpu.vector_store %arg10[%c0_58, %c0_59, %c0_60], %354 {strides = array<i32>} : memref<2x2x32xf32, #tpu.memory_space<vmem>>, vector<1x2x32xf32>,
    %c0_61 = arith.constant 0 : index
    %c0_62 = arith.constant 0 : index
    %c0_63 = arith.constant 0 : index
    %355 = vector.load %arg11[%c0_61, %c0_62, %c0_63] : memref<2x2x32xf32, #tpu.memory_space<vmem>>, vector<1x2x32xf32>
    %356 = vector.shape_cast %355 : vector<1x2x32xf32> to vector<2x32xf32>
    %357 = vector.shape_cast %311 : vector<2x32xf32> to vector<1x2x32xf32>
    tpu.vector_store %arg11[%c0_61, %c0_62, %c0_63], %357 {strides = array<i32>} : memref<2x2x32xf32, #tpu.memory_space<vmem>>, vector<1x2x32xf32>,
    %c1_64 = arith.constant 1 : index
    %c0_65 = arith.constant 0 : index
    %c0_66 = arith.constant 0 : index
    %358 = vector.load %arg10[%c1_64, %c0_65, %c0_66] : memref<2x2x32xf32, #tpu.memory_space<vmem>>, vector<1x2x32xf32>
    %359 = vector.shape_cast %358 : vector<1x2x32xf32> to vector<2x32xf32>
    %360 = vector.shape_cast %351 : vector<2x32xf32> to vector<1x2x32xf32>
    tpu.vector_store %arg10[%c1_64, %c0_65, %c0_66], %360 {strides = array<i32>} : memref<2x2x32xf32, #tpu.memory_space<vmem>>, vector<1x2x32xf32>,
    %c1_67 = arith.constant 1 : index
    %c0_68 = arith.constant 0 : index
    %c0_69 = arith.constant 0 : index
    %361 = vector.load %arg11[%c1_67, %c0_68, %c0_69] : memref<2x2x32xf32, #tpu.memory_space<vmem>>, vector<1x2x32xf32>
    %362 = vector.shape_cast %361 : vector<1x2x32xf32> to vector<2x32xf32>
    %363 = vector.shape_cast %349 : vector<2x32xf32> to vector<1x2x32xf32>
    tpu.vector_store %arg11[%c1_67, %c0_68, %c0_69], %363 {strides = array<i32>} : memref<2x2x32xf32, #tpu.memory_space<vmem>>, vector<1x2x32xf32>,
    %364 = tpu.concatenate %103, %141, %179, %217, %255, %293, %331, %351 in 0 : vector<2x32xf32>, vector<2x32xf32>, vector<2x32xf32>, vector<2x32xf32>, vector<2x32xf32>, vector<2x32xf32>, vector<2x32xf32>, vector<2x32xf32> -> vector<16x32xf32>
    %c3 = arith.constant 3 : index
    %c0_70 = arith.constant 0 : index
    %365 = vector.load %arg6[%c3, %c0_70] : memref<8x4xf32, #tpu.memory_space<vmem>>, vector<1x4xf32>
    %c4 = arith.constant 4 : index
    %c0_71 = arith.constant 0 : index
    %366 = vector.load %arg6[%c4, %c0_71] : memref<8x4xf32, #tpu.memory_space<vmem>>, vector<1x4xf32>
    %c5 = arith.constant 5 : index
    %c0_72 = arith.constant 0 : index
    %367 = vector.load %arg6[%c5, %c0_72] : memref<8x4xf32, #tpu.memory_space<vmem>>, vector<1x4xf32>
    %c6 = arith.constant 6 : index
    %c0_73 = arith.constant 0 : index
    %368 = vector.load %arg6[%c6, %c0_73] : memref<8x4xf32, #tpu.memory_space<vmem>>, vector<1x4xf32>
    %c7 = arith.constant 7 : index
    %c0_74 = arith.constant 0 : index
    %369 = vector.load %arg6[%c7, %c0_74] : memref<8x4xf32, #tpu.memory_space<vmem>>, vector<1x1xf32>
    %c0_75 = arith.constant 0 : index
    %c0_76 = arith.constant 0 : index
    %370 = vector.load %arg5[%c0_75, %c0_76] : memref<32x4xf32, #tpu.memory_space<vmem>>, vector<32x4xf32>
    %cst_77 = arith.constant dense<0.000000e+00> : vector<16x4xf32>
    %371 = tpu.matmul %364, %370, %cst_77 {dimension_numbers = #tpu.dot_dimension_numbers<[1], [0], [0], [1], [0, 0, 1, 1], [], []>} : vector<16x32xf32>, vector<32x4xf32>, vector<16x4xf32> -> vector<16x4xf32>
    %372 = vector.broadcast %365 : vector<1x4xf32> to vector<16x4xf32>
    %373 = arith.addf %371, %372 : vector<16x4xf32>
    %cst_78 = arith.constant dense<0.000000e+00> : vector<4xf32>
    %374 = vector.multi_reduction <add>, %373, %cst_78 [0] : vector<16x4xf32> to vector<4xf32>
    %375 = vector.shape_cast %374 : vector<4xf32> to vector<1x4xf32>
    %cst_79 = arith.constant 1.600000e+01 : f32
    %376 = vector.broadcast %cst_79 : f32 to vector<1x4xf32>
    %377 = arith.divf %375, %376 : vector<1x4xf32>
    %378 = vector.broadcast %377 : vector<1x4xf32> to vector<16x4xf32>
    %379 = arith.subf %373, %378 : vector<16x4xf32>
    %380 = arith.mulf %379, %379 : vector<16x4xf32>
    %cst_80 = arith.constant dense<0.000000e+00> : vector<4xf32>
    %381 = vector.multi_reduction <add>, %380, %cst_80 [0] : vector<16x4xf32> to vector<4xf32>
    %382 = vector.shape_cast %381 : vector<4xf32> to vector<1x4xf32>
    %cst_81 = arith.constant 1.600000e+01 : f32
    %383 = vector.broadcast %cst_81 : f32 to vector<1x4xf32>
    %384 = arith.divf %382, %383 : vector<1x4xf32>
    %385 = vector.broadcast %377 : vector<1x4xf32> to vector<16x4xf32>
    %386 = arith.subf %373, %385 : vector<16x4xf32>
    %cst_82 = arith.constant 9.99999974E-6 : f32
    %387 = vector.broadcast %cst_82 : f32 to vector<1x4xf32>
    %388 = arith.addf %384, %387 : vector<1x4xf32>
    %389 = math.rsqrt %388 : vector<1x4xf32>
    %390 = vector.broadcast %389 : vector<1x4xf32> to vector<16x4xf32>
    %391 = arith.mulf %386, %390 : vector<16x4xf32>
    %392 = vector.broadcast %366 : vector<1x4xf32> to vector<16x4xf32>
    %393 = arith.mulf %391, %392 : vector<16x4xf32>
    %394 = vector.broadcast %367 : vector<1x4xf32> to vector<16x4xf32>
    %395 = arith.addf %393, %394 : vector<16x4xf32>
    %396 = math.tanh %395 : vector<16x4xf32>
    %cst_83 = arith.constant dense<0.000000e+00> : vector<1x16xf32>
    %397 = tpu.matmul %368, %396, %cst_83 {dimension_numbers = #tpu.dot_dimension_numbers<[1], [1], [0], [0], [0, 0, 1, 0], [], []>} : vector<1x4xf32>, vector<16x4xf32>, vector<1x16xf32> -> vector<1x16xf32>
    %398 = vector.broadcast %369 : vector<1x1xf32> to vector<1x16xf32>
    %399 = arith.addf %397, %398 : vector<1x16xf32>
    %c0_84 = arith.constant 0 : index
    %c0_85 = arith.constant 0 : index
    %400 = vector.load %arg9[%c0_84, %c0_85] : memref<1x16xf32, #tpu.memory_space<vmem>>, vector<1x16xf32>
    tpu.vector_store %arg9[%c0_84, %c0_85], %399 {strides = array<i32>} : memref<1x16xf32, #tpu.memory_space<vmem>>, vector<1x16xf32>,
    return
  }
}

</mosaic_0001>

<llo_original>
// kernel: forward.1
$region0: #{forward.1}
  #allocation0 [shape = 'u32[]', space=smem, size = 0x4, offset = 0x4, fixed_abs, tag = 'smem constant byte address 0x4 - core index']
  #allocation1 [shape = 'u32[72,128]{1,0:T(1,128)}', space=vmem, size = 0x9000, scoped, tag = 'internal scratch']
  %s0 = inlined_call_operand.vmem [shape: f32[16,4], index: 0, kind: input, shape index: {}]
  %s1 = inlined_call_operand.vmem [shape: f32[4,4], index: 1, kind: input, shape index: {}]
  %s2 = inlined_call_operand.vmem [shape: f32[4,128], index: 2, kind: input, shape index: {}]
  %s3 = inlined_call_operand.vmem [shape: f32[64,256], index: 3, kind: input, shape index: {}]
  %s4 = inlined_call_operand.vmem [shape: f32[2,128], index: 4, kind: input, shape index: {}]
  %s5 = inlined_call_operand.vmem [shape: f32[32,4], index: 5, kind: input, shape index: {}]
  %s6 = inlined_call_operand.vmem [shape: f32[8,4], index: 6, kind: input, shape index: {}]
  %s7 = inlined_call_operand.vmem [shape: f32[2,2,32], index: 7, kind: input, shape index: {}, may-alias: {7,10}]
  %s8 = inlined_call_operand.vmem [shape: f32[2,2,32], index: 8, kind: input, shape index: {}, may-alias: {8,11}]
  %s9 = inlined_call_operand.vmem [shape: f32[1,16], index: 9, kind: output, shape index: {0}]
  %s10 = inlined_call_operand.vmem [shape: f32[2,2,32], index: 10, kind: output, shape index: {1}, may-alias: {7,10}]
  %s11 = inlined_call_operand.vmem [shape: f32[2,2,32], index: 11, kind: output, shape index: {2}, may-alias: {8,11}]
  %12 = xla_tuple %s9, %s10, %s11
  %s13 = sld [smem:[#allocation0]]
  $region62: #{forward.1} parent=0
    _
  %s15 = ssub.s32 1, %s13
  %s16 = scalar_select 0, %s15, %s13
  // Predicated region
  $region2: #{forward.1} parent=0 // pred_check
    _
  $region3: #{forward.1} parent=0 // pred_check_branch
    %18 = sbr.rel (0) target = $region5
  $region4: #{forward.1} parent=0 // pred_region
    _
  $region5: #{forward.1} parent=0 // pred_fallthru
    _
  // Predicated region
  $region6: #{forward.1} parent=0 // pred_check
    _
  $region7: #{forward.1} parent=0 // pred_check_branch
    %20 = sbr.rel (0) target = $region9
  $region8: #{forward.1} parent=0 // pred_region
    _
  $region9: #{forward.1} parent=0 // pred_fallthru
    _
  // Predicated region
  $region10: #{forward.1} parent=0 // pred_check
    _
  $region11: #{forward.1} parent=0 // pred_check_branch
    %22 = sbr.rel (0) target = $region13
  $region12: #{forward.1} parent=0 // pred_region
    _
  $region13: #{forward.1} parent=0 // pred_fallthru
    _
  // Predicated region
  $region14: #{forward.1} parent=0 // pred_check
    _
  $region15: #{forward.1} parent=0 // pred_check_branch
    %24 = sbr.rel (0) target = $region17
  $region16: #{forward.1} parent=0 // pred_region
    _
  $region17: #{forward.1} parent=0 // pred_fallthru
    _
  // Predicated region
  $region18: #{forward.1} parent=0 // pred_check
    _
  $region19: #{forward.1} parent=0 // pred_check_branch
    %26 = sbr.rel (0) target = $region21
  $region20: #{forward.1} parent=0 // pred_region
    _
  $region21: #{forward.1} parent=0 // pred_fallthru
    _
  // Predicated region
  $region22: #{forward.1} parent=0 // pred_check
    _
  $region23: #{forward.1} parent=0 // pred_check_branch
    %28 = sbr.rel (0) target = $region25
  $region24: #{forward.1} parent=0 // pred_region
    _
  $region25: #{forward.1} parent=0 // pred_fallthru
    _
  // Predicated region
  $region26: #{forward.1} parent=0 // pred_check
    _
  $region27: #{forward.1} parent=0 // pred_check_branch
    %30 = sbr.rel (0) target = $region29
  $region28: #{forward.1} parent=0 // pred_region
    _
  $region29: #{forward.1} parent=0 // pred_fallthru
    _
  // Predicated region
  $region30: #{forward.1} parent=0 // pred_check
    _
  $region31: #{forward.1} parent=0 // pred_check_branch
    %32 = sbr.rel (0) target = $region33
  $region32: #{forward.1} parent=0 // pred_region
    _
  $region33: #{forward.1} parent=0 // pred_fallthru
    _
  // Predicated region
  $region34: #{forward.1} parent=0 // pred_check
    _
  $region35: #{forward.1} parent=0 // pred_check_branch
    %34 = sbr.rel (0) target = $region37
  $region36: #{forward.1} parent=0 // pred_region
    _
  $region37: #{forward.1} parent=0 // pred_fallthru
    _
  %v35 = vld [vmem:[%s0] sm:$0xff]
  %v36 = vld [vmem:[%s0 + $0x8] sm:$0xff]
  %v37 = vld [vmem:[%s6] sm:$0x1]
  %v38 = vld [vmem:[%s6 + $0x1] sm:$0x1]
  %v39 = vld [vmem:[%s6 + $0x2] sm:$0x1]
  %v40 = vld [vmem:[%s1] sm:$0xf]
  %v41 = vperm.slane %v37, 0
  %vm42 = vcmask 31744
  %v44 = vsel %vm42, %v35, 0
  %v47 = vsel %vm42, %v36, 0
  %vm49 = vcmask 1043456
  %v51 = vsel %vm49, %v40, 0
  %53 = vmatpush.msra.mxu0 0.0
  %54 = vmatpush.msra.mxu0 0.0
  %55 = vmatpush.msra.mxu0 0.0
  %56 = vmatpush.msra.mxu0 0.0
  %57 = vmatpush.msra.mxu0 0.0
  %58 = vmatpush.msra.mxu0 0.0
  %59 = vmatpush.msra.mxu0 0.0
  %60 = vmatpush.msra.mxu0 0.0
  %61 = vmatpush.msra.mxu0 0.0
  %62 = vmatpush.msra.mxu0 0.0
  %63 = vmatpush.msra.mxu0 0.0
  %64 = vmatpush.msra.mxu0 0.0
  %65 = vmatpush.msra.mxu0 0.0
  %66 = vmatpush.msra.mxu0 0.0
  %67 = vmatpush.msra.mxu0 0.0
  %68 = vmatpush.msra.mxu0 %v51
  %69 = vmatmul.f32.gmra.mxu0 %v44
  %v70 = vpop.f32.mrf.mxu0
  %v71 = vadd.f32 %v41, %v70
  %72 = vmatmul.f32.gmra.mxu0 %v47
  %v73 = vpop.f32.mrf.mxu0
  %v74 = vadd.f32 %v41, %v73
  %75 = vdwg.mxu0
  %v76 = vsel %vm42, %v71, 0.0
  %v77 = vsel %vm42, %v74, 0.0
  %v78 = vadd.f32 %v76, %v77
  %v79 = vrot.slane %v78, 4
  %v80 = vadd.f32 %v78, %v79
  %v81 = vrot.slane %v80, 2
  %v82 = vadd.f32 %v80, %v81
  %v83 = vrot.slane %v82, 1
  %v84 = vadd.f32 %v82, %v83
  %v85 = vrcp.pop 16.0
  %v86 = vmul.f32 16.0, %v85
  %v87 = vsub.f32 1.0, %v86
  %v88 = vmul.f32 %v85, %v87
  %v89 = vadd.f32 %v85, %v88
  %vm90 = vweird.f32 %v85
  %v91 = vsel %vm90, %v85, %v89
  %v92 = vmul.f32 %v84, %v91
  %v93 = vsub.f32 %v71, %v92
  %v94 = vsub.f32 %v74, %v92
  %v95 = vmul.f32 %v93, %v93
  %v96 = vmul.f32 %v94, %v94
  %v97 = vsel %vm42, %v95, 0.0
  %v98 = vsel %vm42, %v96, 0.0
  %v99 = vadd.f32 %v97, %v98
  %v100 = vrot.slane %v99, 4
  %v101 = vadd.f32 %v99, %v100
  %v102 = vrot.slane %v101, 2
  %v103 = vadd.f32 %v101, %v102
  %v104 = vrot.slane %v103, 1
  %v105 = vadd.f32 %v103, %v104
  %v106 = vmul.f32 %v105, %v91
  %v107 = vadd.f32 %v106, 1e-05
  %v108 = vrsqrt.pop %v107
  %v109 = vmul.f32 %v108, %v107
  %v110 = vmul.f32 %v109, %v108
  %v111 = vmul.f32 0.5, %v110
  %v112 = vsub.f32 1.5, %v111
  %v113 = vmul.f32 %v108, %v112
  %vm114 = vweird.f32 %v107
  %vm115 = vweird.f32 %v108
  %vm116 = vmor %vm114, %vm115
  %v117 = vsel %vm116, %v108, %v113
  %v118 = vmul.f32 %v93, %v117
  %v119 = vmul.f32 %v94, %v117
  %v120 = vperm.slane %v38, 0
  %v121 = vmul.f32 %v118, %v120
  %v122 = vmul.f32 %v119, %v120
  %v123 = vperm.slane %v39, 0
  %v124 = vadd.f32 %v121, %v123
  %v125 = vadd.f32 %v122, %v123
  %v126 = vtanh.pop %v124
  %v127 = vtanh.pop %v125
  %v128 = vld [vmem:[%s2] sm:$0xf]
  %v129 = vld [vmem:[%s4] sm:$0x1]
  %v130 = vperm.slane %v129, 0
  %v132 = vsel %vm42, %v126, 0
  %v135 = vsel %vm42, %v127, 0
  %v138 = vsel %vm49, %v128, 0
  %140 = vmatpush.msra.mxu0 0.0
  %141 = vmatpush.msra.mxu0 0.0
  %142 = vmatpush.msra.mxu0 0.0
  %143 = vmatpush.msra.mxu0 0.0
  %144 = vmatpush.msra.mxu0 0.0
  %145 = vmatpush.msra.mxu0 0.0
  %146 = vmatpush.msra.mxu0 0.0
  %147 = vmatpush.msra.mxu0 0.0
  %148 = vmatpush.msra.mxu0 0.0
  %149 = vmatpush.msra.mxu0 0.0
  %150 = vmatpush.msra.mxu0 0.0
  %151 = vmatpush.msra.mxu0 0.0
  %152 = vmatpush.msra.mxu0 0.0
  %153 = vmatpush.msra.mxu0 0.0
  %154 = vmatpush.msra.mxu0 0.0
  %155 = vmatpush.msra.mxu0 %v138
  %156 = vmatmul.f32.gmra.mxu0 %v132
  %v157 = vpop.f32.mrf.mxu0
  %v158 = vadd.f32 %v130, %v157
  %159 = vmatmul.f32.gmra.mxu0 %v135
  %v160 = vpop.f32.mrf.mxu0
  %v161 = vadd.f32 %v130, %v160
  %162 = vdwg.mxu0
  %v163 = vld [vmem:[%s3] sm:$0xff]
  %v164 = vld [vmem:[%s3 + $0x8] sm:$0xff]
  %v165 = vld [vmem:[%s3 + $0x10] sm:$0xff]
  %v166 = vld [vmem:[%s3 + $0x18] sm:$0xff]
  %v167 = vld [vmem:[%s3 + $0x20] sm:$0xff]
  %v168 = vld [vmem:[%s3 + $0x28] sm:$0xff]
  %v169 = vld [vmem:[%s3 + $0x30] sm:$0xff]
  %v170 = vld [vmem:[%s3 + $0x38] sm:$0xff]
  %v171 = vld [vmem:[%s3 + $0x40] sm:$0xff]
  %v172 = vld [vmem:[%s3 + $0x48] sm:$0xff]
  %v173 = vld [vmem:[%s3 + $0x50] sm:$0xff]
  %v174 = vld [vmem:[%s3 + $0x58] sm:$0xff]
  %v175 = vld [vmem:[%s3 + $0x60] sm:$0xff]
  %v176 = vld [vmem:[%s3 + $0x68] sm:$0xff]
  %v177 = vld [vmem:[%s3 + $0x70] sm:$0xff]
  %v178 = vld [vmem:[%s3 + $0x78] sm:$0xff]
  %v179 = vld [vmem:[%s4 + $0x1] sm:$0x1]
  %v180 = vld [vmem:[%s7] sm:$0x3]
  %s181 = scalar_lea.vmem %s7, 2
  %v182 = vld [vmem:[%s181] sm:$0x3]
  %v183 = vld [vmem:[%s8] sm:$0x3]
  %s184 = scalar_lea.vmem %s8, 2
  %v185 = vld [vmem:[%s184] sm:$0x3]
  %187 = vrot.lane.b32.xlu0 %v182, 32
  %v188 = vpop.permute.xlu0 %187
  %vm190 = vcmask 261120
  %v191 = vsel %vm190, %v180, %v188
  %vm192 = vcmask 523264
  %v194 = vsel %vm192, %v191, 0
  %196 = vmatpush.msra.mxu0 0.0
  %197 = vmatpush.msra.mxu0 0.0
  %198 = vmatpush.msra.mxu0 0.0
  %199 = vmatpush.msra.mxu0 0.0
  %200 = vmatpush.msra.mxu0 0.0
  %201 = vmatpush.msra.mxu0 0.0
  %202 = vmatpush.msra.mxu0 0.0
  %203 = vmatpush.msra.mxu0 0.0
  %204 = vmatpush.msra.mxu0 %v177
  %205 = vmatpush.msra.mxu0 %v175
  %206 = vmatpush.msra.mxu0 %v173
  %207 = vmatpush.msra.mxu0 %v171
  %208 = vmatpush.msra.mxu0 %v169
  %209 = vmatpush.msra.mxu0 %v167
  %210 = vmatpush.msra.mxu0 %v165
  %211 = vmatpush.msra.mxu0 %v163
  %212 = vmatmul.f32.gmra.mxu0 %v194
  %v213 = vpop.f32.mrf.mxu0
  %v214 = vadd.f32 0.0, %v213
  %215 = vdwg.mxu0
  %v216 = vadd.f32 %v214, %v158
  %v217 = vxor.u32 %v216, 2147483648
  %v218 = vmul.f32 %v217, 1.442695
  %v219 = vpow.pop %v218
  %v220 = vadd.f32 %v219, 1.0
  %v221 = vrcp.pop %v220
  %v222 = vmul.f32 %v220, %v221
  %v223 = vsub.f32 1.0, %v222
  %v224 = vmul.f32 %v221, %v223
  %v225 = vadd.f32 %v221, %v224
  %vm226 = vweird.f32 %v220
  %vm227 = vweird.f32 %v221
  %vm228 = vmor %vm226, %vm227
  %v229 = vsel %vm228, %v221, %v225
  %v230 = vand.u32 2147483647, %v220
  %vm231 = vcmp.eq.f32.partialorder %v230, 8.507059e+37
  %v232 = vand.u32 %v220, 2147483648
  %v233 = vor.u32 1.1754944e-38, %v232
  %v234 = vsel %vm231, %v233, %v229
  %v235 = vmul.f32 1.0, %v234
  %v236 = vtanh.pop %v216
  %238 = vrot.lane.b32.xlu0 %v183, 32
  %v239 = vpop.permute.xlu0 %238
  %v241 = vmul.f32 %v235, %v239
  %243 = vrot.lane.b32.xlu0 %v236, 64
  %v244 = vpop.permute.xlu0 %243
  %v246 = vmul.f32 %v235, %v244
  %248 = vrot.lane.b32.xlu0 %v246, 32
  %v249 = vpop.permute.xlu0 %248
  %v251 = vadd.f32 %v241, %v249
  %v252 = vtanh.pop %v251
  %254 = vrot.lane.b32.xlu0 %v252, 64
  %v255 = vpop.permute.xlu0 %254
  %v257 = vmul.f32 %v235, %v255
  %259 = vrot.lane.b32.xlu0 %v257, 32
  %v260 = vpop.permute.xlu0 %259
  %v262 = vsel %vm190, %v260, %v188
  %v264 = vsel %vm192, %v262, 0
  %266 = vmatpush.msra.mxu0 0.0
  %267 = vmatpush.msra.mxu0 0.0
  %268 = vmatpush.msra.mxu0 0.0
  %269 = vmatpush.msra.mxu0 0.0
  %270 = vmatpush.msra.mxu0 0.0
  %271 = vmatpush.msra.mxu0 0.0
  %272 = vmatpush.msra.mxu0 0.0
  %273 = vmatpush.msra.mxu0 0.0
  %274 = vmatpush.msra.mxu0 %v177
  %275 = vmatpush.msra.mxu0 %v175
  %276 = vmatpush.msra.mxu0 %v173
  %277 = vmatpush.msra.mxu0 %v171
  %278 = vmatpush.msra.mxu0 %v169
  %279 = vmatpush.msra.mxu0 %v167
  %280 = vmatpush.msra.mxu0 %v165
  %281 = vmatpush.msra.mxu0 %v163
  %282 = vmatmul.f32.gmra.mxu0 %v264
  %v283 = vpop.f32.mrf.mxu0
  %v284 = vadd.f32 0.0, %v283
  %285 = vdwg.mxu0
  %286 = vmatpush.msra.mxu0 0.0
  %287 = vmatpush.msra.mxu0 0.0
  %288 = vmatpush.msra.mxu0 0.0
  %289 = vmatpush.msra.mxu0 0.0
  %290 = vmatpush.msra.mxu0 0.0
  %291 = vmatpush.msra.mxu0 0.0
  %292 = vmatpush.msra.mxu0 0.0
  %293 = vmatpush.msra.mxu0 0.0
  %294 = vmatpush.msra.mxu0 %v178
  %295 = vmatpush.msra.mxu0 %v176
  %296 = vmatpush.msra.mxu0 %v174
  %297 = vmatpush.msra.mxu0 %v172
  %298 = vmatpush.msra.mxu0 %v170
  %299 = vmatpush.msra.mxu0 %v168
  %300 = vmatpush.msra.mxu0 %v166
  %301 = vmatpush.msra.mxu0 %v164
  %302 = vmatmul.f32.gmra.mxu0 %v264
  %v303 = vpop.f32.mrf.mxu0
  %v304 = vadd.f32 0.0, %v303
  %305 = vdwg.mxu0
  %v307 = vrot.slane %v158, 2
  %v309 = vadd.f32 %v284, %v307
  %v310 = vxor.u32 %v309, 2147483648
  %v311 = vmul.f32 %v310, 1.442695
  %v312 = vpow.pop %v311
  %v313 = vadd.f32 %v312, 1.0
  %v314 = vrcp.pop %v313
  %v315 = vmul.f32 %v313, %v314
  %v316 = vsub.f32 1.0, %v315
  %v317 = vmul.f32 %v314, %v316
  %v318 = vadd.f32 %v314, %v317
  %vm319 = vweird.f32 %v313
  %vm320 = vweird.f32 %v314
  %vm321 = vmor %vm319, %vm320
  %v322 = vsel %vm321, %v314, %v318
  %v323 = vand.u32 2147483647, %v313
  %vm324 = vcmp.eq.f32.partialorder %v323, 8.507059e+37
  %v325 = vand.u32 %v313, 2147483648
  %v326 = vor.u32 1.1754944e-38, %v325
  %v327 = vsel %vm324, %v326, %v322
  %v328 = vmul.f32 1.0, %v327
  %v329 = vtanh.pop %v309
  %v330 = vmul.f32 %v328, %v251
  %332 = vrot.lane.b32.xlu0 %v329, 64
  %v333 = vpop.permute.xlu0 %332
  %v335 = vmul.f32 %v328, %v333
  %337 = vrot.lane.b32.xlu0 %v335, 32
  %v338 = vpop.permute.xlu0 %337
  %v340 = vadd.f32 %v330, %v338
  %v341 = vtanh.pop %v340
  %343 = vrot.lane.b32.xlu0 %v341, 64
  %v344 = vpop.permute.xlu0 %343
  %v346 = vmul.f32 %v328, %v344
  %v347 = vperm.slane %v179, 0
  %v348 = vadd.f32 %v304, %v347
  %v349 = vxor.u32 %v348, 2147483648
  %v350 = vmul.f32 %v349, 1.442695
  %v351 = vpow.pop %v350
  %v352 = vadd.f32 %v351, 1.0
  %v353 = vrcp.pop %v352
  %v354 = vmul.f32 %v352, %v353
  %v355 = vsub.f32 1.0, %v354
  %v356 = vmul.f32 %v353, %v355
  %v357 = vadd.f32 %v353, %v356
  %vm358 = vweird.f32 %v352
  %vm359 = vweird.f32 %v353
  %vm360 = vmor %vm358, %vm359
  %v361 = vsel %vm360, %v353, %v357
  %v362 = vand.u32 2147483647, %v352
  %vm363 = vcmp.eq.f32.partialorder %v362, 8.507059e+37
  %v364 = vand.u32 %v352, 2147483648
  %v365 = vor.u32 1.1754944e-38, %v364
  %v366 = vsel %vm363, %v365, %v361
  %v367 = vmul.f32 1.0, %v366
  %v368 = vtanh.pop %v348
  %370 = vrot.lane.b32.xlu0 %v185, 32
  %v371 = vpop.permute.xlu0 %370
  %v373 = vmul.f32 %v367, %v371
  %375 = vrot.lane.b32.xlu0 %v368, 64
  %v376 = vpop.permute.xlu0 %375
  %v378 = vmul.f32 %v367, %v376
  %380 = vrot.lane.b32.xlu0 %v378, 32
  %v381 = vpop.permute.xlu0 %380
  %v383 = vadd.f32 %v373, %v381
  %v384 = vtanh.pop %v383
  %386 = vrot.lane.b32.xlu0 %v384, 64
  %v387 = vpop.permute.xlu0 %386
  %v389 = vmul.f32 %v367, %v387
  %391 = vrot.lane.b32.xlu0 %v346, 32
  %v392 = vpop.permute.xlu0 %391
  %395 = vrot.lane.b32.xlu0 %v389, 64
  %v396 = vpop.permute.xlu0 %395
  %v398 = vsel %vm190, %v392, %v396
  %v400 = vsel %vm192, %v398, 0
  %402 = vmatpush.msra.mxu0 0.0
  %403 = vmatpush.msra.mxu0 0.0
  %404 = vmatpush.msra.mxu0 0.0
  %405 = vmatpush.msra.mxu0 0.0
  %406 = vmatpush.msra.mxu0 0.0
  %407 = vmatpush.msra.mxu0 0.0
  %408 = vmatpush.msra.mxu0 0.0
  %409 = vmatpush.msra.mxu0 0.0
  %410 = vmatpush.msra.mxu0 %v177
  %411 = vmatpush.msra.mxu0 %v175
  %412 = vmatpush.msra.mxu0 %v173
  %413 = vmatpush.msra.mxu0 %v171
  %414 = vmatpush.msra.mxu0 %v169
  %415 = vmatpush.msra.mxu0 %v167
  %416 = vmatpush.msra.mxu0 %v165
  %417 = vmatpush.msra.mxu0 %v163
  %418 = vmatmul.f32.gmra.mxu0 %v400
  %v419 = vpop.f32.mrf.mxu0
  %v420 = vadd.f32 0.0, %v419
  %421 = vdwg.mxu0
  %422 = vmatpush.msra.mxu0 0.0
  %423 = vmatpush.msra.mxu0 0.0
  %424 = vmatpush.msra.mxu0 0.0
  %425 = vmatpush.msra.mxu0 0.0
  %426 = vmatpush.msra.mxu0 0.0
  %427 = vmatpush.msra.mxu0 0.0
  %428 = vmatpush.msra.mxu0 0.0
  %429 = vmatpush.msra.mxu0 0.0
  %430 = vmatpush.msra.mxu0 %v178
  %431 = vmatpush.msra.mxu0 %v176
  %432 = vmatpush.msra.mxu0 %v174
  %433 = vmatpush.msra.mxu0 %v172
  %434 = vmatpush.msra.mxu0 %v170
  %435 = vmatpush.msra.mxu0 %v168
  %436 = vmatpush.msra.mxu0 %v166
  %437 = vmatpush.msra.mxu0 %v164
  %438 = vmatmul.f32.gmra.mxu0 %v400
  %v439 = vpop.f32.mrf.mxu0
  %v440 = vadd.f32 0.0, %v439
  %441 = vdwg.mxu0
  %v442 = vrot.slane %v158, 4
  %v444 = vadd.f32 %v420, %v442
  %v445 = vxor.u32 %v444, 2147483648
  %v446 = vmul.f32 %v445, 1.442695
  %v447 = vpow.pop %v446
  %v448 = vadd.f32 %v447, 1.0
  %v449 = vrcp.pop %v448
  %v450 = vmul.f32 %v448, %v449
  %v451 = vsub.f32 1.0, %v450
  %v452 = vmul.f32 %v449, %v451
  %v453 = vadd.f32 %v449, %v452
  %vm454 = vweird.f32 %v448
  %vm455 = vweird.f32 %v449
  %vm456 = vmor %vm454, %vm455
  %v457 = vsel %vm456, %v449, %v453
  %v458 = vand.u32 2147483647, %v448
  %vm459 = vcmp.eq.f32.partialorder %v458, 8.507059e+37
  %v460 = vand.u32 %v448, 2147483648
  %v461 = vor.u32 1.1754944e-38, %v460
  %v462 = vsel %vm459, %v461, %v457
  %v463 = vmul.f32 1.0, %v462
  %v464 = vtanh.pop %v444
  %v465 = vmul.f32 %v463, %v340
  %467 = vrot.lane.b32.xlu0 %v464, 64
  %v468 = vpop.permute.xlu0 %467
  %v470 = vmul.f32 %v463, %v468
  %472 = vrot.lane.b32.xlu0 %v470, 32
  %v473 = vpop.permute.xlu0 %472
  %v475 = vadd.f32 %v465, %v473
  %v476 = vtanh.pop %v475
  %478 = vrot.lane.b32.xlu0 %v476, 64
  %v479 = vpop.permute.xlu0 %478
  %v481 = vmul.f32 %v463, %v479
  %v482 = vadd.f32 %v440, %v347
  %v483 = vxor.u32 %v482, 2147483648
  %v484 = vmul.f32 %v483, 1.442695
  %v485 = vpow.pop %v484
  %v486 = vadd.f32 %v485, 1.0
  %v487 = vrcp.pop %v486
  %v488 = vmul.f32 %v486, %v487
  %v489 = vsub.f32 1.0, %v488
  %v490 = vmul.f32 %v487, %v489
  %v491 = vadd.f32 %v487, %v490
  %vm492 = vweird.f32 %v486
  %vm493 = vweird.f32 %v487
  %vm494 = vmor %vm492, %vm493
  %v495 = vsel %vm494, %v487, %v491
  %v496 = vand.u32 2147483647, %v486
  %vm497 = vcmp.eq.f32.partialorder %v496, 8.507059e+37
  %v498 = vand.u32 %v486, 2147483648
  %v499 = vor.u32 1.1754944e-38, %v498
  %v500 = vsel %vm497, %v499, %v495
  %v501 = vmul.f32 1.0, %v500
  %v502 = vtanh.pop %v482
  %v503 = vmul.f32 %v501, %v383
  %505 = vrot.lane.b32.xlu0 %v502, 64
  %v506 = vpop.permute.xlu0 %505
  %v508 = vmul.f32 %v501, %v506
  %510 = vrot.lane.b32.xlu0 %v508, 32
  %v511 = vpop.permute.xlu0 %510
  %v513 = vadd.f32 %v503, %v511
  %v514 = vtanh.pop %v513
  %516 = vrot.lane.b32.xlu0 %v514, 64
  %v517 = vpop.permute.xlu0 %516
  %v519 = vmul.f32 %v501, %v517
  %521 = vrot.lane.b32.xlu0 %v481, 32
  %v522 = vpop.permute.xlu0 %521
  %525 = vrot.lane.b32.xlu0 %v519, 64
  %v526 = vpop.permute.xlu0 %525
  %v528 = vsel %vm190, %v522, %v526
  %v530 = vsel %vm192, %v528, 0
  %532 = vmatpush.msra.mxu0 0.0
  %533 = vmatpush.msra.mxu0 0.0
  %534 = vmatpush.msra.mxu0 0.0
  %535 = vmatpush.msra.mxu0 0.0
  %536 = vmatpush.msra.mxu0 0.0
  %537 = vmatpush.msra.mxu0 0.0
  %538 = vmatpush.msra.mxu0 0.0
  %539 = vmatpush.msra.mxu0 0.0
  %540 = vmatpush.msra.mxu0 %v177
  %541 = vmatpush.msra.mxu0 %v175
  %542 = vmatpush.msra.mxu0 %v173
  %543 = vmatpush.msra.mxu0 %v171
  %544 = vmatpush.msra.mxu0 %v169
  %545 = vmatpush.msra.mxu0 %v167
  %546 = vmatpush.msra.mxu0 %v165
  %547 = vmatpush.msra.mxu0 %v163
  %548 = vmatmul.f32.gmra.mxu0 %v530
  %v549 = vpop.f32.mrf.mxu0
  %v550 = vadd.f32 0.0, %v549
  %551 = vdwg.mxu0
  %552 = vmatpush.msra.mxu0 0.0
  %553 = vmatpush.msra.mxu0 0.0
  %554 = vmatpush.msra.mxu0 0.0
  %555 = vmatpush.msra.mxu0 0.0
  %556 = vmatpush.msra.mxu0 0.0
  %557 = vmatpush.msra.mxu0 0.0
  %558 = vmatpush.msra.mxu0 0.0
  %559 = vmatpush.msra.mxu0 0.0
  %560 = vmatpush.msra.mxu0 %v178
  %561 = vmatpush.msra.mxu0 %v176
  %562 = vmatpush.msra.mxu0 %v174
  %563 = vmatpush.msra.mxu0 %v172
  %564 = vmatpush.msra.mxu0 %v170
  %565 = vmatpush.msra.mxu0 %v168
  %566 = vmatpush.msra.mxu0 %v166
  %567 = vmatpush.msra.mxu0 %v164
  %568 = vmatmul.f32.gmra.mxu0 %v530
  %v569 = vpop.f32.mrf.mxu0
  %v570 = vadd.f32 0.0, %v569
  %571 = vdwg.mxu0
  %v572 = vrot.slane %v158, 6
  %v574 = vadd.f32 %v550, %v572
  %v575 = vxor.u32 %v574, 2147483648
  %v576 = vmul.f32 %v575, 1.442695
  %v577 = vpow.pop %v576
  %v578 = vadd.f32 %v577, 1.0
  %v579 = vrcp.pop %v578
  %v580 = vmul.f32 %v578, %v579
  %v581 = vsub.f32 1.0, %v580
  %v582 = vmul.f32 %v579, %v581
  %v583 = vadd.f32 %v579, %v582
  %vm584 = vweird.f32 %v578
  %vm585 = vweird.f32 %v579
  %vm586 = vmor %vm584, %vm585
  %v587 = vsel %vm586, %v579, %v583
  %v588 = vand.u32 2147483647, %v578
  %vm589 = vcmp.eq.f32.partialorder %v588, 8.507059e+37
  %v590 = vand.u32 %v578, 2147483648
  %v591 = vor.u32 1.1754944e-38, %v590
  %v592 = vsel %vm589, %v591, %v587
  %v593 = vmul.f32 1.0, %v592
  %v594 = vtanh.pop %v574
  %v595 = vmul.f32 %v593, %v475
  %597 = vrot.lane.b32.xlu0 %v594, 64
  %v598 = vpop.permute.xlu0 %597
  %v600 = vmul.f32 %v593, %v598
  %602 = vrot.lane.b32.xlu0 %v600, 32
  %v603 = vpop.permute.xlu0 %602
  %v605 = vadd.f32 %v595, %v603
  %v606 = vtanh.pop %v605
  %608 = vrot.lane.b32.xlu0 %v606, 64
  %v609 = vpop.permute.xlu0 %608
  %v611 = vmul.f32 %v593, %v609
  %v612 = vadd.f32 %v570, %v347
  %v613 = vxor.u32 %v612, 2147483648
  %v614 = vmul.f32 %v613, 1.442695
  %v615 = vpow.pop %v614
  %v616 = vadd.f32 %v615, 1.0
  %v617 = vrcp.pop %v616
  %v618 = vmul.f32 %v616, %v617
  %v619 = vsub.f32 1.0, %v618
  %v620 = vmul.f32 %v617, %v619
  %v621 = vadd.f32 %v617, %v620
  %vm622 = vweird.f32 %v616
  %vm623 = vweird.f32 %v617
  %vm624 = vmor %vm622, %vm623
  %v625 = vsel %vm624, %v617, %v621
  %v626 = vand.u32 2147483647, %v616
  %vm627 = vcmp.eq.f32.partialorder %v626, 8.507059e+37
  %v628 = vand.u32 %v616, 2147483648
  %v629 = vor.u32 1.1754944e-38, %v628
  %v630 = vsel %vm627, %v629, %v625
  %v631 = vmul.f32 1.0, %v630
  %v632 = vtanh.pop %v612
  %v633 = vmul.f32 %v631, %v513
  %635 = vrot.lane.b32.xlu0 %v632, 64
  %v636 = vpop.permute.xlu0 %635
  %v638 = vmul.f32 %v631, %v636
  %640 = vrot.lane.b32.xlu0 %v638, 32
  %v641 = vpop.permute.xlu0 %640
  %v643 = vadd.f32 %v633, %v641
  %v644 = vtanh.pop %v643
  %646 = vrot.lane.b32.xlu0 %v644, 64
  %v647 = vpop.permute.xlu0 %646
  %v649 = vmul.f32 %v631, %v647
  %651 = vrot.lane.b32.xlu0 %v611, 32
  %v652 = vpop.permute.xlu0 %651
  %655 = vrot.lane.b32.xlu0 %v649, 64
  %v656 = vpop.permute.xlu0 %655
  %v658 = vsel %vm190, %v652, %v656
  %v660 = vsel %vm192, %v658, 0
  %662 = vmatpush.msra.mxu0 0.0
  %663 = vmatpush.msra.mxu0 0.0
  %664 = vmatpush.msra.mxu0 0.0
  %665 = vmatpush.msra.mxu0 0.0
  %666 = vmatpush.msra.mxu0 0.0
  %667 = vmatpush.msra.mxu0 0.0
  %668 = vmatpush.msra.mxu0 0.0
  %669 = vmatpush.msra.mxu0 0.0
  %670 = vmatpush.msra.mxu0 %v177
  %671 = vmatpush.msra.mxu0 %v175
  %672 = vmatpush.msra.mxu0 %v173
  %673 = vmatpush.msra.mxu0 %v171
  %674 = vmatpush.msra.mxu0 %v169
  %675 = vmatpush.msra.mxu0 %v167
  %676 = vmatpush.msra.mxu0 %v165
  %677 = vmatpush.msra.mxu0 %v163
  %678 = vmatmul.f32.gmra.mxu0 %v660
  %v679 = vpop.f32.mrf.mxu0
  %v680 = vadd.f32 0.0, %v679
  %681 = vdwg.mxu0
  %682 = vmatpush.msra.mxu0 0.0
  %683 = vmatpush.msra.mxu0 0.0
  %684 = vmatpush.msra.mxu0 0.0
  %685 = vmatpush.msra.mxu0 0.0
  %686 = vmatpush.msra.mxu0 0.0
  %687 = vmatpush.msra.mxu0 0.0
  %688 = vmatpush.msra.mxu0 0.0
  %689 = vmatpush.msra.mxu0 0.0
  %690 = vmatpush.msra.mxu0 %v178
  %691 = vmatpush.msra.mxu0 %v176
  %692 = vmatpush.msra.mxu0 %v174
  %693 = vmatpush.msra.mxu0 %v172
  %694 = vmatpush.msra.mxu0 %v170
  %695 = vmatpush.msra.mxu0 %v168
  %696 = vmatpush.msra.mxu0 %v166
  %697 = vmatpush.msra.mxu0 %v164
  %698 = vmatmul.f32.gmra.mxu0 %v660
  %v699 = vpop.f32.mrf.mxu0
  %v700 = vadd.f32 0.0, %v699
  %701 = vdwg.mxu0
  %v702 = vadd.f32 %v680, %v161
  %v703 = vxor.u32 %v702, 2147483648
  %v704 = vmul.f32 %v703, 1.442695
  %v705 = vpow.pop %v704
  %v706 = vadd.f32 %v705, 1.0
  %v707 = vrcp.pop %v706
  %v708 = vmul.f32 %v706, %v707
  %v709 = vsub.f32 1.0, %v708
  %v710 = vmul.f32 %v707, %v709
  %v711 = vadd.f32 %v707, %v710
  %vm712 = vweird.f32 %v706
  %vm713 = vweird.f32 %v707
  %vm714 = vmor %vm712, %vm713
  %v715 = vsel %vm714, %v707, %v711
  %v716 = vand.u32 2147483647, %v706
  %vm717 = vcmp.eq.f32.partialorder %v716, 8.507059e+37
  %v718 = vand.u32 %v706, 2147483648
  %v719 = vor.u32 1.1754944e-38, %v718
  %v720 = vsel %vm717, %v719, %v715
  %v721 = vmul.f32 1.0, %v720
  %v722 = vtanh.pop %v702
  %v723 = vmul.f32 %v721, %v605
  %725 = vrot.lane.b32.xlu0 %v722, 64
  %v726 = vpop.permute.xlu0 %725
  %v728 = vmul.f32 %v721, %v726
  %730 = vrot.lane.b32.xlu0 %v728, 32
  %v731 = vpop.permute.xlu0 %730
  %v733 = vadd.f32 %v723, %v731
  %v734 = vtanh.pop %v733
  %736 = vrot.lane.b32.xlu0 %v734, 64
  %v737 = vpop.permute.xlu0 %736
  %v739 = vmul.f32 %v721, %v737
  %v740 = vadd.f32 %v700, %v347
  %v741 = vxor.u32 %v740, 2147483648
  %v742 = vmul.f32 %v741, 1.442695
  %v743 = vpow.pop %v742
  %v744 = vadd.f32 %v743, 1.0
  %v745 = vrcp.pop %v744
  %v746 = vmul.f32 %v744, %v745
  %v747 = vsub.f32 1.0, %v746
  %v748 = vmul.f32 %v745, %v747
  %v749 = vadd.f32 %v745, %v748
  %vm750 = vweird.f32 %v744
  %vm751 = vweird.f32 %v745
  %vm752 = vmor %vm750, %vm751
  %v753 = vsel %vm752, %v745, %v749
  %v754 = vand.u32 2147483647, %v744
  %vm755 = vcmp.eq.f32.partialorder %v754, 8.507059e+37
  %v756 = vand.u32 %v744, 2147483648
  %v757 = vor.u32 1.1754944e-38, %v756
  %v758 = vsel %vm755, %v757, %v753
  %v759 = vmul.f32 1.0, %v758
  %v760 = vtanh.pop %v740
  %v761 = vmul.f32 %v759, %v643
  %763 = vrot.lane.b32.xlu0 %v760, 64
  %v764 = vpop.permute.xlu0 %763
  %v766 = vmul.f32 %v759, %v764
  %768 = vrot.lane.b32.xlu0 %v766, 32
  %v769 = vpop.permute.xlu0 %768
  %v771 = vadd.f32 %v761, %v769
  %v772 = vtanh.pop %v771
  %774 = vrot.lane.b32.xlu0 %v772, 64
  %v775 = vpop.permute.xlu0 %774
  %v777 = vmul.f32 %v759, %v775
  %779 = vrot.lane.b32.xlu0 %v739, 32
  %v780 = vpop.permute.xlu0 %779
  %783 = vrot.lane.b32.xlu0 %v777, 64
  %v784 = vpop.permute.xlu0 %783
  %v786 = vsel %vm190, %v780, %v784
  %v788 = vsel %vm192, %v786, 0
  %790 = vmatpush.msra.mxu0 0.0
  %791 = vmatpush.msra.mxu0 0.0
  %792 = vmatpush.msra.mxu0 0.0
  %793 = vmatpush.msra.mxu0 0.0
  %794 = vmatpush.msra.mxu0 0.0
  %795 = vmatpush.msra.mxu0 0.0
  %796 = vmatpush.msra.mxu0 0.0
  %797 = vmatpush.msra.mxu0 0.0
  %798 = vmatpush.msra.mxu0 %v177
  %799 = vmatpush.msra.mxu0 %v175
  %800 = vmatpush.msra.mxu0 %v173
  %801 = vmatpush.msra.mxu0 %v171
  %802 = vmatpush.msra.mxu0 %v169
  %803 = vmatpush.msra.mxu0 %v167
  %804 = vmatpush.msra.mxu0 %v165
  %805 = vmatpush.msra.mxu0 %v163
  %806 = vmatmul.f32.gmra.mxu0 %v788
  %v807 = vpop.f32.mrf.mxu0
  %v808 = vadd.f32 0.0, %v807
  %809 = vdwg.mxu0
  %810 = vmatpush.msra.mxu0 0.0
  %811 = vmatpush.msra.mxu0 0.0
  %812 = vmatpush.msra.mxu0 0.0
  %813 = vmatpush.msra.mxu0 0.0
  %814 = vmatpush.msra.mxu0 0.0
  %815 = vmatpush.msra.mxu0 0.0
  %816 = vmatpush.msra.mxu0 0.0
  %817 = vmatpush.msra.mxu0 0.0
  %818 = vmatpush.msra.mxu0 %v178
  %819 = vmatpush.msra.mxu0 %v176
  %820 = vmatpush.msra.mxu0 %v174
  %821 = vmatpush.msra.mxu0 %v172
  %822 = vmatpush.msra.mxu0 %v170
  %823 = vmatpush.msra.mxu0 %v168
  %824 = vmatpush.msra.mxu0 %v166
  %825 = vmatpush.msra.mxu0 %v164
  %826 = vmatmul.f32.gmra.mxu0 %v788
  %v827 = vpop.f32.mrf.mxu0
  %v828 = vadd.f32 0.0, %v827
  %829 = vdwg.mxu0
  %v831 = vrot.slane %v161, 2
  %v833 = vadd.f32 %v808, %v831
  %v834 = vxor.u32 %v833, 2147483648
  %v835 = vmul.f32 %v834, 1.442695
  %v836 = vpow.pop %v835
  %v837 = vadd.f32 %v836, 1.0
  %v838 = vrcp.pop %v837
  %v839 = vmul.f32 %v837, %v838
  %v840 = vsub.f32 1.0, %v839
  %v841 = vmul.f32 %v838, %v840
  %v842 = vadd.f32 %v838, %v841
  %vm843 = vweird.f32 %v837
  %vm844 = vweird.f32 %v838
  %vm845 = vmor %vm843, %vm844
  %v846 = vsel %vm845, %v838, %v842
  %v847 = vand.u32 2147483647, %v837
  %vm848 = vcmp.eq.f32.partialorder %v847, 8.507059e+37
  %v849 = vand.u32 %v837, 2147483648
  %v850 = vor.u32 1.1754944e-38, %v849
  %v851 = vsel %vm848, %v850, %v846
  %v852 = vmul.f32 1.0, %v851
  %v853 = vtanh.pop %v833
  %v854 = vmul.f32 %v852, %v733
  %856 = vrot.lane.b32.xlu0 %v853, 64
  %v857 = vpop.permute.xlu0 %856
  %v859 = vmul.f32 %v852, %v857
  %861 = vrot.lane.b32.xlu0 %v859, 32
  %v862 = vpop.permute.xlu0 %861
  %v864 = vadd.f32 %v854, %v862
  %v865 = vtanh.pop %v864
  %867 = vrot.lane.b32.xlu0 %v865, 64
  %v868 = vpop.permute.xlu0 %867
  %v870 = vmul.f32 %v852, %v868
  %v871 = vadd.f32 %v828, %v347
  %v872 = vxor.u32 %v871, 2147483648
  %v873 = vmul.f32 %v872, 1.442695
  %v874 = vpow.pop %v873
  %v875 = vadd.f32 %v874, 1.0
  %v876 = vrcp.pop %v875
  %v877 = vmul.f32 %v875, %v876
  %v878 = vsub.f32 1.0, %v877
  %v879 = vmul.f32 %v876, %v878
  %v880 = vadd.f32 %v876, %v879
  %vm881 = vweird.f32 %v875
  %vm882 = vweird.f32 %v876
  %vm883 = vmor %vm881, %vm882
  %v884 = vsel %vm883, %v876, %v880
  %v885 = vand.u32 2147483647, %v875
  %vm886 = vcmp.eq.f32.partialorder %v885, 8.507059e+37
  %v887 = vand.u32 %v875, 2147483648
  %v888 = vor.u32 1.1754944e-38, %v887
  %v889 = vsel %vm886, %v888, %v884
  %v890 = vmul.f32 1.0, %v889
  %v891 = vtanh.pop %v871
  %v892 = vmul.f32 %v890, %v771
  %894 = vrot.lane.b32.xlu0 %v891, 64
  %v895 = vpop.permute.xlu0 %894
  %v897 = vmul.f32 %v890, %v895
  %899 = vrot.lane.b32.xlu0 %v897, 32
  %v900 = vpop.permute.xlu0 %899
  %v902 = vadd.f32 %v892, %v900
  %v903 = vtanh.pop %v902
  %905 = vrot.lane.b32.xlu0 %v903, 64
  %v906 = vpop.permute.xlu0 %905
  %v908 = vmul.f32 %v890, %v906
  %910 = vrot.lane.b32.xlu0 %v870, 32
  %v911 = vpop.permute.xlu0 %910
  %914 = vrot.lane.b32.xlu0 %v908, 64
  %v915 = vpop.permute.xlu0 %914
  %v917 = vsel %vm190, %v911, %v915
  %v919 = vsel %vm192, %v917, 0
  %921 = vmatpush.msra.mxu0 0.0
  %922 = vmatpush.msra.mxu0 0.0
  %923 = vmatpush.msra.mxu0 0.0
  %924 = vmatpush.msra.mxu0 0.0
  %925 = vmatpush.msra.mxu0 0.0
  %926 = vmatpush.msra.mxu0 0.0
  %927 = vmatpush.msra.mxu0 0.0
  %928 = vmatpush.msra.mxu0 0.0
  %929 = vmatpush.msra.mxu0 %v177
  %930 = vmatpush.msra.mxu0 %v175
  %931 = vmatpush.msra.mxu0 %v173
  %932 = vmatpush.msra.mxu0 %v171
  %933 = vmatpush.msra.mxu0 %v169
  %934 = vmatpush.msra.mxu0 %v167
  %935 = vmatpush.msra.mxu0 %v165
  %936 = vmatpush.msra.mxu0 %v163
  %937 = vmatmul.f32.gmra.mxu0 %v919
  %v938 = vpop.f32.mrf.mxu0
  %v939 = vadd.f32 0.0, %v938
  %940 = vdwg.mxu0
  %941 = vmatpush.msra.mxu0 0.0
  %942 = vmatpush.msra.mxu0 0.0
  %943 = vmatpush.msra.mxu0 0.0
  %944 = vmatpush.msra.mxu0 0.0
  %945 = vmatpush.msra.mxu0 0.0
  %946 = vmatpush.msra.mxu0 0.0
  %947 = vmatpush.msra.mxu0 0.0
  %948 = vmatpush.msra.mxu0 0.0
  %949 = vmatpush.msra.mxu0 %v178
  %950 = vmatpush.msra.mxu0 %v176
  %951 = vmatpush.msra.mxu0 %v174
  %952 = vmatpush.msra.mxu0 %v172
  %953 = vmatpush.msra.mxu0 %v170
  %954 = vmatpush.msra.mxu0 %v168
  %955 = vmatpush.msra.mxu0 %v166
  %956 = vmatpush.msra.mxu0 %v164
  %957 = vmatmul.f32.gmra.mxu0 %v919
  %v958 = vpop.f32.mrf.mxu0
  %v959 = vadd.f32 0.0, %v958
  %960 = vdwg.mxu0
  %v961 = vrot.slane %v161, 4
  %v963 = vadd.f32 %v939, %v961
  %v964 = vxor.u32 %v963, 2147483648
  %v965 = vmul.f32 %v964, 1.442695
  %v966 = vpow.pop %v965
  %v967 = vadd.f32 %v966, 1.0
  %v968 = vrcp.pop %v967
  %v969 = vmul.f32 %v967, %v968
  %v970 = vsub.f32 1.0, %v969
  %v971 = vmul.f32 %v968, %v970
  %v972 = vadd.f32 %v968, %v971
  %vm973 = vweird.f32 %v967
  %vm974 = vweird.f32 %v968
  %vm975 = vmor %vm973, %vm974
  %v976 = vsel %vm975, %v968, %v972
  %v977 = vand.u32 2147483647, %v967
  %vm978 = vcmp.eq.f32.partialorder %v977, 8.507059e+37
  %v979 = vand.u32 %v967, 2147483648
  %v980 = vor.u32 1.1754944e-38, %v979
  %v981 = vsel %vm978, %v980, %v976
  %v982 = vmul.f32 1.0, %v981
  %v983 = vtanh.pop %v963
  %v984 = vmul.f32 %v982, %v864
  %986 = vrot.lane.b32.xlu0 %v983, 64
  %v987 = vpop.permute.xlu0 %986
  %v989 = vmul.f32 %v982, %v987
  %991 = vrot.lane.b32.xlu0 %v989, 32
  %v992 = vpop.permute.xlu0 %991
  %v994 = vadd.f32 %v984, %v992
  %v995 = vtanh.pop %v994
  %997 = vrot.lane.b32.xlu0 %v995, 64
  %v998 = vpop.permute.xlu0 %997
  %v1000 = vmul.f32 %v982, %v998
  %v1001 = vadd.f32 %v959, %v347
  %v1002 = vxor.u32 %v1001, 2147483648
  %v1003 = vmul.f32 %v1002, 1.442695
  %v1004 = vpow.pop %v1003
  %v1005 = vadd.f32 %v1004, 1.0
  %v1006 = vrcp.pop %v1005
  %v1007 = vmul.f32 %v1005, %v1006
  %v1008 = vsub.f32 1.0, %v1007
  %v1009 = vmul.f32 %v1006, %v1008
  %v1010 = vadd.f32 %v1006, %v1009
  %vm1011 = vweird.f32 %v1005
  %vm1012 = vweird.f32 %v1006
  %vm1013 = vmor %vm1011, %vm1012
  %v1014 = vsel %vm1013, %v1006, %v1010
  %v1015 = vand.u32 2147483647, %v1005
  %vm1016 = vcmp.eq.f32.partialorder %v1015, 8.507059e+37
  %v1017 = vand.u32 %v1005, 2147483648
  %v1018 = vor.u32 1.1754944e-38, %v1017
  %v1019 = vsel %vm1016, %v1018, %v1014
  %v1020 = vmul.f32 1.0, %v1019
  %v1021 = vtanh.pop %v1001
  %v1022 = vmul.f32 %v1020, %v902
  %1024 = vrot.lane.b32.xlu0 %v1021, 64
  %v1025 = vpop.permute.xlu0 %1024
  %v1027 = vmul.f32 %v1020, %v1025
  %1029 = vrot.lane.b32.xlu0 %v1027, 32
  %v1030 = vpop.permute.xlu0 %1029
  %v1032 = vadd.f32 %v1022, %v1030
  %v1033 = vtanh.pop %v1032
  %1035 = vrot.lane.b32.xlu0 %v1033, 64
  %v1036 = vpop.permute.xlu0 %1035
  %v1038 = vmul.f32 %v1020, %v1036
  %1040 = vrot.lane.b32.xlu0 %v1000, 32
  %v1041 = vpop.permute.xlu0 %1040
  %1044 = vrot.lane.b32.xlu0 %v1038, 64
  %v1045 = vpop.permute.xlu0 %1044
  %v1047 = vsel %vm190, %v1041, %v1045
  %v1049 = vsel %vm192, %v1047, 0
  %1051 = vmatpush.msra.mxu0 0.0
  %1052 = vmatpush.msra.mxu0 0.0
  %1053 = vmatpush.msra.mxu0 0.0
  %1054 = vmatpush.msra.mxu0 0.0
  %1055 = vmatpush.msra.mxu0 0.0
  %1056 = vmatpush.msra.mxu0 0.0
  %1057 = vmatpush.msra.mxu0 0.0
  %1058 = vmatpush.msra.mxu0 0.0
  %1059 = vmatpush.msra.mxu0 %v177
  %1060 = vmatpush.msra.mxu0 %v175
  %1061 = vmatpush.msra.mxu0 %v173
  %1062 = vmatpush.msra.mxu0 %v171
  %1063 = vmatpush.msra.mxu0 %v169
  %1064 = vmatpush.msra.mxu0 %v167
  %1065 = vmatpush.msra.mxu0 %v165
  %1066 = vmatpush.msra.mxu0 %v163
  %1067 = vmatmul.f32.gmra.mxu0 %v1049
  %v1068 = vpop.f32.mrf.mxu0
  %v1069 = vadd.f32 0.0, %v1068
  %1070 = vdwg.mxu0
  %1071 = vmatpush.msra.mxu0 0.0
  %1072 = vmatpush.msra.mxu0 0.0
  %1073 = vmatpush.msra.mxu0 0.0
  %1074 = vmatpush.msra.mxu0 0.0
  %1075 = vmatpush.msra.mxu0 0.0
  %1076 = vmatpush.msra.mxu0 0.0
  %1077 = vmatpush.msra.mxu0 0.0
  %1078 = vmatpush.msra.mxu0 0.0
  %1079 = vmatpush.msra.mxu0 %v178
  %1080 = vmatpush.msra.mxu0 %v176
  %1081 = vmatpush.msra.mxu0 %v174
  %1082 = vmatpush.msra.mxu0 %v172
  %1083 = vmatpush.msra.mxu0 %v170
  %1084 = vmatpush.msra.mxu0 %v168
  %1085 = vmatpush.msra.mxu0 %v166
  %1086 = vmatpush.msra.mxu0 %v164
  %1087 = vmatmul.f32.gmra.mxu0 %v1049
  %v1088 = vpop.f32.mrf.mxu0
  %v1089 = vadd.f32 0.0, %v1088
  %1090 = vdwg.mxu0
  %v1091 = vrot.slane %v161, 6
  %v1093 = vadd.f32 %v1069, %v1091
  %v1094 = vxor.u32 %v1093, 2147483648
  %v1095 = vmul.f32 %v1094, 1.442695
  %v1096 = vpow.pop %v1095
  %v1097 = vadd.f32 %v1096, 1.0
  %v1098 = vrcp.pop %v1097
  %v1099 = vmul.f32 %v1097, %v1098
  %v1100 = vsub.f32 1.0, %v1099
  %v1101 = vmul.f32 %v1098, %v1100
  %v1102 = vadd.f32 %v1098, %v1101
  %vm1103 = vweird.f32 %v1097
  %vm1104 = vweird.f32 %v1098
  %vm1105 = vmor %vm1103, %vm1104
  %v1106 = vsel %vm1105, %v1098, %v1102
  %v1107 = vand.u32 2147483647, %v1097
  %vm1108 = vcmp.eq.f32.partialorder %v1107, 8.507059e+37
  %v1109 = vand.u32 %v1097, 2147483648
  %v1110 = vor.u32 1.1754944e-38, %v1109
  %v1111 = vsel %vm1108, %v1110, %v1106
  %v1112 = vmul.f32 1.0, %v1111
  %v1113 = vtanh.pop %v1093
  %v1114 = vmul.f32 %v1112, %v994
  %1116 = vrot.lane.b32.xlu0 %v1113, 64
  %v1117 = vpop.permute.xlu0 %1116
  %v1119 = vmul.f32 %v1112, %v1117
  %1121 = vrot.lane.b32.xlu0 %v1119, 32
  %v1122 = vpop.permute.xlu0 %1121
  %v1124 = vadd.f32 %v1114, %v1122
  %v1125 = vtanh.pop %v1124
  %1127 = vrot.lane.b32.xlu0 %v1125, 64
  %v1128 = vpop.permute.xlu0 %1127
  %v1130 = vmul.f32 %v1112, %v1128
  %v1131 = vadd.f32 %v1089, %v347
  %v1132 = vxor.u32 %v1131, 2147483648
  %v1133 = vmul.f32 %v1132, 1.442695
  %v1134 = vpow.pop %v1133
  %v1135 = vadd.f32 %v1134, 1.0
  %v1136 = vrcp.pop %v1135
  %v1137 = vmul.f32 %v1135, %v1136
  %v1138 = vsub.f32 1.0, %v1137
  %v1139 = vmul.f32 %v1136, %v1138
  %v1140 = vadd.f32 %v1136, %v1139
  %vm1141 = vweird.f32 %v1135
  %vm1142 = vweird.f32 %v1136
  %vm1143 = vmor %vm1141, %vm1142
  %v1144 = vsel %vm1143, %v1136, %v1140
  %v1145 = vand.u32 2147483647, %v1135
  %vm1146 = vcmp.eq.f32.partialorder %v1145, 8.507059e+37
  %v1147 = vand.u32 %v1135, 2147483648
  %v1148 = vor.u32 1.1754944e-38, %v1147
  %v1149 = vsel %vm1146, %v1148, %v1144
  %v1150 = vmul.f32 1.0, %v1149
  %v1151 = vtanh.pop %v1131
  %v1152 = vmul.f32 %v1150, %v1032
  %1154 = vrot.lane.b32.xlu0 %v1151, 64
  %v1155 = vpop.permute.xlu0 %1154
  %v1157 = vmul.f32 %v1150, %v1155
  %1159 = vrot.lane.b32.xlu0 %v1157, 32
  %v1160 = vpop.permute.xlu0 %1159
  %v1162 = vadd.f32 %v1152, %v1160
  %v1163 = vtanh.pop %v1162
  %1165 = vrot.lane.b32.xlu0 %v1163, 64
  %v1166 = vpop.permute.xlu0 %1165
  %v1168 = vmul.f32 %v1150, %v1166
  %1170 = vrot.lane.b32.xlu0 %v1130, 32
  %v1171 = vpop.permute.xlu0 %1170
  %1174 = vrot.lane.b32.xlu0 %v1168, 64
  %v1175 = vpop.permute.xlu0 %1174
  %v1177 = vsel %vm190, %v1171, %v1175
  %v1179 = vsel %vm192, %v1177, 0
  %1181 = vmatpush.msra.mxu0 0.0
  %1182 = vmatpush.msra.mxu0 0.0
  %1183 = vmatpush.msra.mxu0 0.0
  %1184 = vmatpush.msra.mxu0 0.0
  %1185 = vmatpush.msra.mxu0 0.0
  %1186 = vmatpush.msra.mxu0 0.0
  %1187 = vmatpush.msra.mxu0 0.0
  %1188 = vmatpush.msra.mxu0 0.0
  %1189 = vmatpush.msra.mxu0 %v178
  %1190 = vmatpush.msra.mxu0 %v176
  %1191 = vmatpush.msra.mxu0 %v174
  %1192 = vmatpush.msra.mxu0 %v172
  %1193 = vmatpush.msra.mxu0 %v170
  %1194 = vmatpush.msra.mxu0 %v168
  %1195 = vmatpush.msra.mxu0 %v166
  %1196 = vmatpush.msra.mxu0 %v164
  %1197 = vmatmul.f32.gmra.mxu0 %v1179
  %v1198 = vpop.f32.mrf.mxu0
  %v1199 = vadd.f32 0.0, %v1198
  %1200 = vdwg.mxu0
  %v1201 = vadd.f32 %v1199, %v347
  %v1202 = vxor.u32 %v1201, 2147483648
  %v1203 = vmul.f32 %v1202, 1.442695
  %v1204 = vpow.pop %v1203
  %v1205 = vadd.f32 %v1204, 1.0
  %v1206 = vrcp.pop %v1205
  %v1207 = vmul.f32 %v1205, %v1206
  %v1208 = vsub.f32 1.0, %v1207
  %v1209 = vmul.f32 %v1206, %v1208
  %v1210 = vadd.f32 %v1206, %v1209
  %vm1211 = vweird.f32 %v1205
  %vm1212 = vweird.f32 %v1206
  %vm1213 = vmor %vm1211, %vm1212
  %v1214 = vsel %vm1213, %v1206, %v1210
  %v1215 = vand.u32 2147483647, %v1205
  %vm1216 = vcmp.eq.f32.partialorder %v1215, 8.507059e+37
  %v1217 = vand.u32 %v1205, 2147483648
  %v1218 = vor.u32 1.1754944e-38, %v1217
  %v1219 = vsel %vm1216, %v1218, %v1214
  %v1220 = vmul.f32 1.0, %v1219
  %v1221 = vtanh.pop %v1201
  %v1222 = vmul.f32 %v1220, %v1162
  %1224 = vrot.lane.b32.xlu0 %v1221, 64
  %v1225 = vpop.permute.xlu0 %1224
  %v1227 = vmul.f32 %v1220, %v1225
  %1229 = vrot.lane.b32.xlu0 %v1227, 32
  %v1230 = vpop.permute.xlu0 %1229
  %v1232 = vadd.f32 %v1222, %v1230
  %v1233 = vtanh.pop %v1232
  %1235 = vrot.lane.b32.xlu0 %v1233, 64
  %v1236 = vpop.permute.xlu0 %1235
  %v1238 = vmul.f32 %v1220, %v1236
  %vm1239 = vcmask 254976
  %1240 = vst.msk [vmem:[%s10] sm:$0x3] %vm1239, %v1171
  %1242 = vrot.lane.b32.xlu0 %v1124, 96
  %v1243 = vpop.permute.xlu0 %1242
  %1245 = vst.msk [vmem:[%s11] sm:$0x3] %vm1239, %v1243
  %1247 = vrot.lane.b32.xlu0 %v1238, 32
  %v1248 = vpop.permute.xlu0 %1247
  %s1250 = scalar_lea.vmem %s10, 2
  %1251 = vst.msk [vmem:[%s1250] sm:$0x3] %vm1239, %v1248
  %1253 = vrot.lane.b32.xlu0 %v1232, 96
  %v1254 = vpop.permute.xlu0 %1253
  %s1256 = scalar_lea.vmem %s11, 2
  %1257 = vst.msk [vmem:[%s1256] sm:$0x3] %vm1239, %v1254
  %v1258 = vrot.slane %v519, 6
  %v1260 = vrot.slane %v649, 4
  %v1262 = vrot.slane %v777, 2
  %v1264 = vrot.slane %v1038, 6
  %v1266 = vrot.slane %v1168, 4
  %v1268 = vrot.slane %v1238, 2
  %vm1270 = vcmask 1041408
  %v1271 = vsel %vm1270, %v389, %v1258
  %v1272 = vsel %vm49, %v1271, %v1260
  %vm1273 = vcmask 1045504
  %v1274 = vsel %vm1273, %v1272, %v1262
  %v1275 = vsel %vm1270, %v908, %v1264
  %v1276 = vsel %vm49, %v1275, %v1266
  %v1277 = vsel %vm1273, %v1276, %v1268
  %v1278 = vld [vmem:[%s6 + $0x3] sm:$0x1]
  %v1279 = vld [vmem:[%s6 + $0x4] sm:$0x1]
  %v1280 = vld [vmem:[%s6 + $0x5] sm:$0x1]
  %v1281 = vld [vmem:[%s6 + $0x6] sm:$0x1]
  %v1282 = vld [vmem:[%s6 + $0x7] sm:$0x1]
  %v1283 = vld [vmem:[%s5] sm:$0xff]
  %v1284 = vld [vmem:[%s5 + $0x8] sm:$0xff]
  %v1285 = vld [vmem:[%s5 + $0x10] sm:$0xff]
  %v1286 = vld [vmem:[%s5 + $0x18] sm:$0xff]
  %v1287 = vperm.slane %v1278, 0
  %1290 = vrot.lane.b32.xlu0 %v1274, 32
  %v1291 = vpop.permute.xlu0 %1290
  %1292 = vrot.lane.b32.xlu0 %v1277, 32
  %v1293 = vpop.permute.xlu0 %1292
  %v1294 = vsel %vm190, %v1291, 0
  %v1296 = vsel %vm190, %v1293, 0
  %1298 = vmatpush.msra.mxu0 0.0
  %1299 = vmatpush.msra.mxu0 0.0
  %1300 = vmatpush.msra.mxu0 0.0
  %1301 = vmatpush.msra.mxu0 0.0
  %1302 = vmatpush.msra.mxu0 0.0
  %1303 = vmatpush.msra.mxu0 0.0
  %1304 = vmatpush.msra.mxu0 0.0
  %1305 = vmatpush.msra.mxu0 0.0
  %1306 = vmatpush.msra.mxu0 0.0
  %1307 = vmatpush.msra.mxu0 0.0
  %1308 = vmatpush.msra.mxu0 0.0
  %1309 = vmatpush.msra.mxu0 0.0
  %1310 = vmatpush.msra.mxu0 %v1286
  %1311 = vmatpush.msra.mxu0 %v1285
  %1312 = vmatpush.msra.mxu0 %v1284
  %1313 = vmatpush.msra.mxu0 %v1283
  %1314 = vmatmul.f32.gmra.mxu0 %v1294
  %v1315 = vpop.f32.mrf.mxu0
  %v1316 = vadd.f32 %v1287, %v1315
  %1317 = vmatmul.f32.gmra.mxu0 %v1296
  %v1318 = vpop.f32.mrf.mxu0
  %v1319 = vadd.f32 %v1287, %v1318
  %1320 = vdwg.mxu0
  %v1321 = vsel %vm42, %v1316, 0.0
  %v1322 = vsel %vm42, %v1319, 0.0
  %v1323 = vadd.f32 %v1321, %v1322
  %v1324 = vrot.slane %v1323, 4
  %v1325 = vadd.f32 %v1323, %v1324
  %v1326 = vrot.slane %v1325, 2
  %v1327 = vadd.f32 %v1325, %v1326
  %v1328 = vrot.slane %v1327, 1
  %v1329 = vadd.f32 %v1327, %v1328
  %v1330 = vmul.f32 %v1329, %v91
  %v1331 = vsub.f32 %v1316, %v1330
  %v1332 = vsub.f32 %v1319, %v1330
  %v1333 = vmul.f32 %v1331, %v1331
  %v1334 = vmul.f32 %v1332, %v1332
  %v1335 = vsel %vm42, %v1333, 0.0
  %v1336 = vsel %vm42, %v1334, 0.0
  %v1337 = vadd.f32 %v1335, %v1336
  %v1338 = vrot.slane %v1337, 4
  %v1339 = vadd.f32 %v1337, %v1338
  %v1340 = vrot.slane %v1339, 2
  %v1341 = vadd.f32 %v1339, %v1340
  %v1342 = vrot.slane %v1341, 1
  %v1343 = vadd.f32 %v1341, %v1342
  %v1344 = vmul.f32 %v1343, %v91
  %v1345 = vadd.f32 %v1344, 1e-05
  %v1346 = vrsqrt.pop %v1345
  %v1347 = vmul.f32 %v1346, %v1345
  %v1348 = vmul.f32 %v1347, %v1346
  %v1349 = vmul.f32 0.5, %v1348
  %v1350 = vsub.f32 1.5, %v1349
  %v1351 = vmul.f32 %v1346, %v1350
  %vm1352 = vweird.f32 %v1345
  %vm1353 = vweird.f32 %v1346
  %vm1354 = vmor %vm1352, %vm1353
  %v1355 = vsel %vm1354, %v1346, %v1351
  %v1356 = vmul.f32 %v1331, %v1355
  %v1357 = vmul.f32 %v1332, %v1355
  %v1358 = vperm.slane %v1279, 0
  %v1359 = vmul.f32 %v1356, %v1358
  %v1360 = vmul.f32 %v1357, %v1358
  %v1361 = vperm.slane %v1280, 0
  %v1362 = vadd.f32 %v1359, %v1361
  %v1363 = vadd.f32 %v1360, %v1361
  %v1364 = vtanh.pop %v1362
  %v1365 = vtanh.pop %v1363
  %1367 = vset.pattern.permute.xlu0 0
  %1368 = vperm.xlu0 %1367, %v1282
  %v1369 = vpop.permute.xlu0 %1368
  %v1372 = vsel %vm42, %v1281, 0
  %v1375 = vsel %vm42, %v1364, 0
  %v1378 = vsel %vm42, %v1365, 0
  %1380 = vmatpush.xpose.msra.mxu0 0.0
  %1381 = vmatpush.xpose.msra.mxu0 0.0
  %1382 = vmatpush.xpose.msra.mxu0 0.0
  %1383 = vmatpush.xpose.msra.mxu0 0.0
  %1384 = vmatpush.xpose.msra.mxu0 0.0
  %1385 = vmatpush.xpose.msra.mxu0 0.0
  %1386 = vmatpush.xpose.msra.mxu0 0.0
  %1387 = vmatpush.xpose.msra.mxu0 0.0
  %1388 = vmatpush.xpose.msra.mxu0 0.0
  %1389 = vmatpush.xpose.msra.mxu0 0.0
  %1390 = vmatpush.xpose.msra.mxu0 0.0
  %1391 = vmatpush.xpose.msra.mxu0 0.0
  %1392 = vmatpush.xpose.msra.mxu0 0.0
  %1393 = vmatpush.xpose.msra.mxu0 0.0
  %1394 = vmatpush.xpose.msra.mxu0 %v1378
  %1395 = vmatpush.xpose.msra.mxu0 %v1375
  %1396 = vmatmul.f32.gmra.mxu0 %v1372
  %v1397 = vpop.f32.mrf.mxu0
  %v1398 = vadd.f32 %v1369, %v1397
  %1399 = vdwg.mxu0
  %vm1400 = vcmask 122880
  %1401 = vst.msk [vmem:[%s9] sm:$0x1] %vm1400, %v1398
  // Predicated region
  $region38: #{forward.1} parent=0 // pred_check
    _
  $region39: #{forward.1} parent=0 // pred_check_branch
    %1403 = sbr.rel (0) target = $region41
  $region40: #{forward.1} parent=0 // pred_region
    _
  $region41: #{forward.1} parent=0 // pred_fallthru
    _
  // Predicated region
  $region42: #{forward.1} parent=0 // pred_check
    _
  $region43: #{forward.1} parent=0 // pred_check_branch
    %1405 = sbr.rel (0) target = $region45
  $region44: #{forward.1} parent=0 // pred_region
    _
  $region45: #{forward.1} parent=0 // pred_fallthru
    _
  // Predicated region
  $region46: #{forward.1} parent=0 // pred_check
    _
  $region47: #{forward.1} parent=0 // pred_check_branch
    %1407 = sbr.rel (0) target = $region49
  $region48: #{forward.1} parent=0 // pred_region
    _
  $region49: #{forward.1} parent=0 // pred_fallthru
    _
  // Predicated region
  $region50: #{forward.1} parent=0 // pred_check
    _
  $region51: #{forward.1} parent=0 // pred_check_branch
    %1409 = sbr.rel (0) target = $region53
  $region52: #{forward.1} parent=0 // pred_region
    _
  $region53: #{forward.1} parent=0 // pred_fallthru
    _
  // Predicated region
  $region54: #{forward.1} parent=0 // pred_check
    _
  $region55: #{forward.1} parent=0 // pred_check_branch
    %1411 = sbr.rel (0) target = $region57
  $region56: #{forward.1} parent=0 // pred_region
    _
  $region57: #{forward.1} parent=0 // pred_fallthru
    _
  // Predicated region
  $region58: #{forward.1} parent=0 // pred_check
    _
  $region59: #{forward.1} parent=0 // pred_check_branch
    %1413 = sbr.rel (0) target = $region61
  $region60: #{forward.1} parent=0 // pred_region
    _
  $region61: #{forward.1} parent=0 // pred_fallthru
    _

</llo_original>
